<compile_context>
chip_gen: v7x
topology: tpu7x:2x2x1
jax: 0.10.0
libtpu: 0.0.40
codegen_flags: <defaults>
</compile_context>

<pallas_src>
import functools
import math

import jax
import jax.numpy as jnp
from jax.experimental import pallas as pl
from jax.experimental.pallas import tpu as pltpu


def _round_up(x: int, m: int) -> int:
    return ((x + m - 1) // m) * m


def _pow2_tile(limit: int, cap: int) -> int:
    """Largest power-of-two multiple of 128 that is <= min(limit, cap)."""
    t = 128
    while t * 2 <= min(limit, cap):
        t *= 2
    return t


def _choose_tiles(n: int, row_tile: int, k_tile: int):
    """Pick (row_tile, k_tile, padded_n). Tiles are pow2 multiples of 128 so
    lcm == max and padding overhead stays bounded; row tile is capped so the
    'parallel' row axis has >= 2 tiles (v7x megacore)."""
    n128 = _round_up(max(n, 1), 128)
    kt = _pow2_tile(n128, k_tile)
    rt = _pow2_tile(n128, row_tile)
    if n128 // rt < 2 and rt > 128:   # keep both v7x TensorCores busy
        rt = max(128, rt // 2)
    n_p = _round_up(n, max(rt, kt))
    return rt, kt, n_p


# ---------------------------------------------------------------------------
# Fused kernel:  OUT = diag(dinv) @ A01 @ diag(dinv) @ (X @ W) + bias
#   grid = (row tiles [parallel], k tiles [arbitrary/reduction])
# ---------------------------------------------------------------------------
def _gcn_fused_kernel(a_ref, x_ref, w_ref, dk_ref, di_ref, b_ref, out_ref):
    k = pl.program_id(1)

    @pl.when(k == 0)
    def _():
        out_ref[...] = jnp.zeros_like(out_ref)

    # H_k = X_k @ W recomputed per (i, k); FLOPs are ~fi_p/row_tile of the main
    # matmul and hide under the A-tile DMA. W is VMEM-resident (constant index).
    h_k = jnp.dot(x_ref[...], w_ref[...], preferred_element_type=jnp.float32)
    # Fold the column-side D^-1/2 into H_k (much cheaper than scaling the
    # (row_tile, k_tile) A tile on the VPU).
    h_k = (h_k * dk_ref[...]).astype(a_ref.dtype)

    # Accumulate directly into the resident f32 output block (no scratch).
    out_ref[...] += jnp.dot(a_ref[...], h_k, preferred_element_type=jnp.float32)

    @pl.when(k == pl.num_programs(1) - 1)
    def _():
        # Row-side D^-1/2 and bias, once per row tile.
        out_ref[...] = out_ref[...] * di_ref[...] + b_ref[...]


@functools.partial(jax.jit, static_argnames=("row_tile", "k_tile", "compute_dtype"))
def bayesian_gcn_conv_pallas(x, edge_index, weight, bias, *,
                             row_tile=512, k_tile=512,
                             compute_dtype=jnp.bfloat16):
    """out = D^-1/2 (A + missing self loops) D^-1/2 @ (x @ weight) + bias.

    A/X/W stream in `compute_dtype` (bf16 default, ~1e-2 relative vs f32) with
    f32 accumulation; set compute_dtype=jnp.float32 to match the PyTorch
    module's f32 semantics exactly at ~2x the bandwidth/MXU cost.
    """
    n, f_in = x.shape
    f_out = weight.shape[1]
    out_dtype = x.dtype

    rt, kt, n_p = _choose_tiles(n, row_tile, k_tile)
    fi_p = _round_up(f_in, 128)
    fo_p = _round_up(f_out, 128)

    # ---- graph build: exact f32 degrees from the edge list (O(E+N)), dense
    #      adjacency built ONCE directly at padded shape in the stream dtype --
    src, dst = edge_index[0], edge_index[1]
    ew = jnp.ones(src.shape, jnp.float32)
    # PyG gcn_norm(add_self_loops=True): add a self loop only where missing.
    self_cnt = jnp.zeros((n,), jnp.float32).at[src].add(
        jnp.where(src == dst, 1.0, 0.0))
    need_self = (self_cnt == 0).astype(jnp.float32)
    node_idx = jnp.arange(n, dtype=src.dtype)
    rows = jnp.concatenate([dst, node_idx])
    cols = jnp.concatenate([src, node_idx])
    vals = jnp.concatenate([ew, need_self])

    deg = jnp.zeros((n,), jnp.float32).at[rows].add(vals)
    dinv = jnp.where(deg > 0, jax.lax.rsqrt(deg), 0.0)
    dinv_p = jnp.zeros((n_p, 1), jnp.float32).at[:n, 0].set(dinv)

    # TODO(synk): dense (n_p, n_p) adjacency is fine for small/medium graphs;
    # very large sparse graphs need a gather/scatter propagation kernel.
    # TODO(synk): on v7x, A01 could stream as fp8 (values are small ints) for
    # another ~2x on adjacency bandwidth.
    a01 = jnp.zeros((n_p, n_p), compute_dtype).at[rows, cols].add(
        vals.astype(compute_dtype))

    x_p = jnp.zeros((n_p, fi_p), compute_dtype).at[:n, :f_in].set(
        x.astype(compute_dtype))
    w_p = jnp.zeros((fi_p, fo_p), compute_dtype).at[:f_in, :f_out].set(
        weight.astype(compute_dtype))
    b_p = jnp.zeros((1, fo_p), jnp.float32).at[0, :f_out].set(
        bias.astype(jnp.float32))

    cb = jnp.dtype(compute_dtype).itemsize
    row_steps = n_p // rt
    k_steps = n_p // kt

    # Honest traffic: A read once, X re-read once per row tile (fused
    # recompute), W once, dinv/bias small, f32 output written once.
    bytes_accessed = (n_p * n_p * cb
                      + n_p * fi_p * cb * row_steps
                      + fi_p * fo_p * cb
                      + n_p * fo_p * 4 + 2 * n_p * 4 + fo_p * 4)
    flops = 2 * n_p * n_p * fo_p + 2 * n_p * fi_p * fo_p * row_steps

    # Double-buffered VMEM footprint + headroom (v7x physical cap is 64 MiB).
    vmem_est = (2 * (rt * kt + kt * fi_p + fi_p * fo_p) * cb
                + 2 * rt * fo_p * 4 + 2 * (rt + kt + fo_p) * 4) + (4 << 20)
    vmem_limit = int(min(max(vmem_est, 16 << 20), 64 << 20))

    out_p = pl.pallas_call(
        _gcn_fused_kernel,
        out_shape=jax.ShapeDtypeStruct((n_p, fo_p), jnp.float32),
        grid_spec=pltpu.PrefetchScalarGridSpec(
            num_scalar_prefetch=0,
            grid=(row_steps, k_steps),
            in_specs=[
                pl.BlockSpec((rt, kt), lambda i, k: (i, k)),       # A01 tile
                pl.BlockSpec((kt, fi_p), lambda i, k: (k, 0)),     # X k-tile
                pl.BlockSpec((fi_p, fo_p), lambda i, k: (0, 0)),   # W (resident)
                pl.BlockSpec((kt, 1), lambda i, k: (k, 0)),        # dinv (col side)
                pl.BlockSpec((rt, 1), lambda i, k: (i, 0)),        # dinv (row side)
                pl.BlockSpec((1, fo_p), lambda i, k: (0, 0)),      # bias
            ],
            out_specs=pl.BlockSpec((rt, fo_p), lambda i, k: (i, 0)),
        ),
        compiler_params=pltpu.CompilerParams(
            dimension_semantics=("parallel", "arbitrary"),
            vmem_limit_bytes=vmem_limit,
        ),
        cost_estimate=pl.CostEstimate(
            flops=flops, transcendentals=0, bytes_accessed=bytes_accessed),
    )(a01, x_p, w_p, dinv_p, dinv_p, b_p)

    return out_p[:n, :f_out].astype(out_dtype)


# ---------------------------------------------------------------------------
# Glue: Bayesian parameter handling (parameter-sized, not the hot path)
# ---------------------------------------------------------------------------
def get_sigma(rho):
    return jnp.log(1.0 + jnp.exp(rho))


def gaussian_log_prob(w, mu, sigma):
    return (
        -0.5 * math.log(2.0 * math.pi)
        - jnp.log(sigma + 1e-10)
        - (w - mu) ** 2 / (2.0 * sigma ** 2 + 1e-10)
    )


def gaussian_mixture_log_prob(w, pi, sigma_1, sigma_2):
    p1 = jnp.exp(gaussian_log_prob(w, 0.0, jnp.float32(sigma_1)))
    p2 = jnp.exp(gaussian_log_prob(w, 0.0, jnp.float32(sigma_2)))
    return jnp.log(pi * p1 + (1.0 - pi) * p2 + 1e-10).mean()


def gaussian_posterior_log_prob(w, mu, rho):
    return gaussian_log_prob(w, mu, get_sigma(rho)).mean()


def sample_weight(key, mu, rho):
    eps = jax.random.normal(key, mu.shape, mu.dtype)
    return mu + eps * get_sigma(rho)


def bayesian_gcn_conv_forward(
    x, edge_index, params, key=None, sample=False, calculate_log_probs=False,
    pi=0.5, sigma_1=1.0, sigma_2=1e-6,
):
    """Mirrors BayesianGCNConv.forward in eval mode (self.training == False)."""
    w_mu, w_rho, b_mu, b_rho = params
    if sample:
        kw, kb = jax.random.split(key)
        weight = sample_weight(kw, w_mu, w_rho)
        bias = sample_weight(kb, b_mu, b_rho)
    else:
        weight, bias = w_mu, b_mu

    log_prior = log_q = None
    if calculate_log_probs:
        log_prior = gaussian_mixture_log_prob(weight, pi, sigma_1, sigma_2)
        log_prior = log_prior + gaussian_mixture_log_prob(bias, pi, sigma_1, sigma_2)
        log_q = gaussian_posterior_log_prob(weight, w_mu, w_rho)
        log_q = log_q + gaussian_posterior_log_prob(bias, b_mu, b_rho)

    out = bayesian_gcn_conv_pallas(x, edge_index, weight, bias)
    return out, log_prior, log_q


# ---------------------------------------------------------------------------
if __name__ == "__main__":
    key = jax.random.PRNGKey(0)
    # Non-128-multiple sizes to exercise padding; N=300 -> padded 512 with
    # rt=128, kt=256 -> a (4, 2) grid that exercises both the parallel row
    # axis and the k-reduction accumulation.
    N, F_IN, F_OUT = 300, 48, 40
    k_x, k_w = jax.random.split(key)

    # deterministic parameter init, mirroring reset_parameters():
    #   w_mu ~ N(0, 0.1), w_rho = -3, b_mu = 0, b_rho = -3
    w_mu = 0.1 * jax.random.normal(k_w, (F_IN, F_OUT), jnp.float32)
    w_rho = jnp.full((F_IN, F_OUT), -3.0, jnp.float32)
    b_mu = jnp.zeros((F_OUT,), jnp.float32)
    b_rho = jnp.full((F_OUT,), -3.0, jnp.float32)
    params = (w_mu, w_rho, b_mu, b_rho)

    # node features and a small undirected ring graph
    x = jax.random.normal(k_x, (N, F_IN), jnp.float32)
    s = jnp.arange(N, dtype=jnp.int32)
    d = (s + 1) % N
    edge_index = jnp.stack(
        [jnp.concatenate([s, d]), jnp.concatenate([d, s])]
    )

    out, log_prior, log_q = bayesian_gcn_conv_forward(
        x, edge_index, params, sample=False, calculate_log_probs=True
    )
    out = jax.block_until_ready(out)
    jax.block_until_ready((log_prior, log_q))

    # Reference check mirroring the kernel's bf16-stream / f32-accumulate math.
    src_r, dst_r = edge_index[0], edge_index[1]
    a01_ref = jnp.zeros((N, N), jnp.float32).at[dst_r, src_r].add(1.0)
    diag = jnp.diagonal(a01_ref)
    a01_ref = a01_ref + jnp.diag(jnp.where(diag > 0, 0.0, 1.0))
    deg_ref = a01_ref.sum(axis=1)
    dinv_ref = jnp.where(deg_ref > 0, jax.lax.rsqrt(deg_ref), 0.0)

    bf = lambda v: v.astype(jnp.bfloat16).astype(jnp.float32)
    hp = jax.lax.Precision.HIGHEST
    h_ref = jnp.dot(bf(x), bf(w_mu), precision=hp)          # f32 accum of bf16
    hs_ref = bf(h_ref * dinv_ref[:, None])                   # col-side D^-1/2
    ref = dinv_ref[:, None] * jnp.dot(bf(a01_ref), hs_ref, precision=hp) \
        + b_mu[None, :]

    assert out.shape == (N, F_OUT)
    assert jnp.allclose(out, ref, atol=1e-2, rtol=1e-2), "mismatch vs reference"

    print("KERNEL_OK")
</pallas_src>

<mosaic_0001>
module attributes {stable_mosaic.version = 11 : i64} {
  func.func @_gcn_fused_kernel(%arg0: i32, %arg1: i32, %arg2: memref<128x256xbf16, #tpu.memory_space<vmem>>, %arg3: memref<256x128xbf16, #tpu.memory_space<vmem>>, %arg4: memref<128x128xbf16, #tpu.memory_space<vmem>>, %arg5: memref<256x1xf32, #tpu.memory_space<vmem>>, %arg6: memref<128x1xf32, #tpu.memory_space<vmem>>, %arg7: memref<1x128xf32, #tpu.memory_space<vmem>>, %arg8: memref<128x128xf32, #tpu.memory_space<vmem>>) attributes {dimension_semantics = [#tpu.dimension_semantics<parallel>, #tpu.dimension_semantics<arbitrary>], iteration_bounds = array<i64: 4, 2>, scalar_prefetch = 0 : i64, scratch_operands = 0 : i64, tpu.core_type = #tpu.core_type<tc>, window_params = [{transform_indices = @transform_0, window_bounds = array<i64: 128, 256>}, {transform_indices = @transform_1, window_bounds = array<i64: 256, 128>}, {pipeline_mode = #tpu.pipeline_mode<synchronous>, transform_indices = @transform_2, window_bounds = array<i64: 128, 128>}, {transform_indices = @transform_3, window_bounds = array<i64: 256, 1>}, {transform_indices = @transform_4, window_bounds = array<i64: 128, 1>}, {pipeline_mode = #tpu.pipeline_mode<synchronous>, transform_indices = @transform_5, window_bounds = array<i64: 1, 128>}, {transform_indices = @transform_6, window_bounds = array<i64: 128, 128>}]} {
    %c0_i32 = arith.constant 0 : i32
    %0 = arith.cmpi eq, %arg1, %c0_i32 : i32
    %1 = arith.extui %0 : i1 to i32
    %c0_i32_0 = arith.constant 0 : i32
    %2 = arith.cmpi ne, %1, %c0_i32_0 : i32
    scf.if %2 {
      %cst_14 = arith.constant 0.000000e+00 : f32
      %18 = vector.broadcast %cst_14 : f32 to vector<128x128xf32>
      %c0_15 = arith.constant 0 : index
      %c0_16 = arith.constant 0 : index
      %19 = vector.load %arg8[%c0_15, %c0_16] : memref<128x128xf32, #tpu.memory_space<vmem>>, vector<128x128xf32>
      tpu.vector_store %arg8[%c0_15, %c0_16], %18 {strides = array<i32>} : memref<128x128xf32, #tpu.memory_space<vmem>>, vector<128x128xf32>,
    } else {
    }
    %c0 = arith.constant 0 : index
    %c0_1 = arith.constant 0 : index
    %3 = vector.load %arg3[%c0, %c0_1] : memref<256x128xbf16, #tpu.memory_space<vmem>>, vector<256x128xbf16>
    %c0_2 = arith.constant 0 : index
    %c0_3 = arith.constant 0 : index
    %4 = vector.load %arg4[%c0_2, %c0_3] : memref<128x128xbf16, #tpu.memory_space<vmem>>, vector<128x128xbf16>
    %cst = arith.constant dense<0.000000e+00> : vector<256x128xf32>
    %5 = tpu.matmul %3, %4, %cst {dimension_numbers = #tpu.dot_dimension_numbers<[1], [0], [0], [1], [0, 0, 1, 1], [], []>} : vector<256x128xbf16>, vector<128x128xbf16>, vector<256x128xf32> -> vector<256x128xf32>
    %c0_4 = arith.constant 0 : index
    %c0_5 = arith.constant 0 : index
    %6 = vector.load %arg5[%c0_4, %c0_5] : memref<256x1xf32, #tpu.memory_space<vmem>>, vector<256x1xf32>
    %7 = vector.broadcast %6 : vector<256x1xf32> to vector<256x128xf32>
    %8 = arith.mulf %5, %7 : vector<256x128xf32>
    %9 = arith.truncf %8 : vector<256x128xf32> to vector<256x128xbf16>
    %c0_6 = arith.constant 0 : index
    %c0_7 = arith.constant 0 : index
    %10 = vector.load %arg8[%c0_6, %c0_7] : memref<128x128xf32, #tpu.memory_space<vmem>>, vector<128x128xf32>
    %c0_8 = arith.constant 0 : index
    %c0_9 = arith.constant 0 : index
    %11 = vector.load %arg2[%c0_8, %c0_9] : memref<128x256xbf16, #tpu.memory_space<vmem>>, vector<128x256xbf16>
    %cst_10 = arith.constant dense<0.000000e+00> : vector<128x128xf32>
    %12 = tpu.matmul %11, %9, %cst_10 {dimension_numbers = #tpu.dot_dimension_numbers<[1], [0], [0], [1], [0, 0, 1, 1], [], []>} : vector<128x256xbf16>, vector<256x128xbf16>, vector<128x128xf32> -> vector<128x128xf32>
    %13 = arith.addf %10, %12 : vector<128x128xf32>
    %c0_11 = arith.constant 0 : index
    %c0_12 = arith.constant 0 : index
    %14 = vector.load %arg8[%c0_11, %c0_12] : memref<128x128xf32, #tpu.memory_space<vmem>>, vector<128x128xf32>
    tpu.vector_store %arg8[%c0_11, %c0_12], %13 {strides = array<i32>} : memref<128x128xf32, #tpu.memory_space<vmem>>, vector<128x128xf32>,
    %c1_i32 = arith.constant 1 : i32
    %15 = arith.cmpi eq, %arg1, %c1_i32 : i32
    %16 = arith.extui %15 : i1 to i32
    %c0_i32_13 = arith.constant 0 : i32
    %17 = arith.cmpi ne, %16, %c0_i32_13 : i32
    scf.if %17 {
      %c0_14 = arith.constant 0 : index
      %c0_15 = arith.constant 0 : index
      %18 = vector.load %arg8[%c0_14, %c0_15] : memref<128x128xf32, #tpu.memory_space<vmem>>, vector<128x128xf32>
      %c0_16 = arith.constant 0 : index
      %c0_17 = arith.constant 0 : index
      %19 = vector.load %arg6[%c0_16, %c0_17] : memref<128x1xf32, #tpu.memory_space<vmem>>, vector<128x1xf32>
      %20 = vector.broadcast %19 : vector<128x1xf32> to vector<128x128xf32>
      %21 = arith.mulf %18, %20 : vector<128x128xf32>
      %c0_18 = arith.constant 0 : index
      %c0_19 = arith.constant 0 : index
      %22 = vector.load %arg7[%c0_18, %c0_19] : memref<1x128xf32, #tpu.memory_space<vmem>>, vector<1x128xf32>
      %23 = vector.broadcast %22 : vector<1x128xf32> to vector<128x128xf32>
      %24 = arith.addf %21, %23 : vector<128x128xf32>
      %c0_20 = arith.constant 0 : index
      %c0_21 = arith.constant 0 : index
      %25 = vector.load %arg8[%c0_20, %c0_21] : memref<128x128xf32, #tpu.memory_space<vmem>>, vector<128x128xf32>
      tpu.vector_store %arg8[%c0_20, %c0_21], %24 {strides = array<i32>} : memref<128x128xf32, #tpu.memory_space<vmem>>, vector<128x128xf32>,
    } else {
    }
    return
  }
  func.func @transform_0(%arg0: i32, %arg1: i32) -> (i32, i32) {
    %c0_i32 = arith.constant 0 : i32
    return %arg0, %arg1 : i32, i32
  }
  func.func @transform_1(%arg0: i32, %arg1: i32) -> (i32, i32) {
    %c0_i32 = arith.constant 0 : i32
    %c0_i32_0 = arith.constant 0 : i32
    return %arg1, %c0_i32 : i32, i32
  }
  func.func @transform_2(%arg0: i32, %arg1: i32) -> (i32, i32) {
    %c0_i32 = arith.constant 0 : i32
    %c0_i32_0 = arith.constant 0 : i32
    %c0_i32_1 = arith.constant 0 : i32
    return %c0_i32, %c0_i32_0 : i32, i32
  }
  func.func @transform_3(%arg0: i32, %arg1: i32) -> (i32, i32) {
    %c0_i32 = arith.constant 0 : i32
    %c0_i32_0 = arith.constant 0 : i32
    return %arg1, %c0_i32 : i32, i32
  }
  func.func @transform_4(%arg0: i32, %arg1: i32) -> (i32, i32) {
    %c0_i32 = arith.constant 0 : i32
    %c0_i32_0 = arith.constant 0 : i32
    return %arg0, %c0_i32 : i32, i32
  }
  func.func @transform_5(%arg0: i32, %arg1: i32) -> (i32, i32) {
    %c0_i32 = arith.constant 0 : i32
    %c0_i32_0 = arith.constant 0 : i32
    %c0_i32_1 = arith.constant 0 : i32
    return %c0_i32, %c0_i32_0 : i32, i32
  }
  func.func @transform_6(%arg0: i32, %arg1: i32) -> (i32, i32) {
    %c0_i32 = arith.constant 0 : i32
    %c0_i32_0 = arith.constant 0 : i32
    return %arg0, %c0_i32 : i32, i32
  }
}

</mosaic_0001>

<llo_original>
// kernel: bayesian_gcn_conv_pallas.1
$region0: #{bayesian_gcn_conv_pallas.1}
  #allocation0 [shape = 'u32[]', space=smem, size = 0x4, offset = 0x4, fixed_abs, tag = 'smem constant byte address 0x4 - core index']
  #allocation1 [shape = 'u32[144,128]{1,0:T(1,128)}', space=vmem, size = 0x12000, scoped, tag = 'internal scratch']
  %s0 = inlined_call_operand.vmem [shape: bf16[512,512], index: 0, kind: input, shape index: {}]
  %s1 = inlined_call_operand.vmem [shape: bf16[512,128], index: 1, kind: input, shape index: {}]
  %s2 = inlined_call_operand.vmem [shape: bf16[128,128], index: 2, kind: input, shape index: {}]
  %s3 = inlined_call_operand.vmem [shape: f32[512,1], index: 3, kind: input, shape index: {}, may-alias: {3,4}]
  %s4 = inlined_call_operand.vmem [shape: f32[512,1], index: 4, kind: input, shape index: {}, may-alias: {3,4}]
  %s5 = inlined_call_operand.vmem [shape: f32[1,128], index: 5, kind: input, shape index: {}]
  %s6 = inlined_call_operand.vmem [shape: f32[512,128], index: 6, kind: output, shape index: {}]
  %s7 = sld [smem:[#allocation0]]
  $region103: #{bayesian_gcn_conv_pallas.1} parent=0
    _
  %s9 = ssub.s32 1, %s7
  %s10 = scalar_select 0, %s9, %s7
  $region1: #{bayesian_gcn_conv_pallas.1} parent=0
    #allocation2 [shape = 'u8[131072]{0}', space=vmem, size = 0x20000, scoped, tag = 'input window, operand 0']
    loop: start=0, step=1, limit=10
    $region2: #{bayesian_gcn_conv_pallas.1} parent=1 // loop_pre_header
      _
    $region3: #{bayesian_gcn_conv_pallas.1} parent=1 // loop_header
      %s12 = sphi 0, %s16
      %p13 = scmp.ge.s32.totalorder %s12, 10
      %s19 = sphi 0, %s31
      %s20 = sphi 0, %s27
      %s21 = sphi 0, %s19
      %s22 = sphi 0, %s20
      %s23 = sphi 0, %s21
      %s24 = sphi 0, %s22
      %s36 = sphi 0, %s38
      %s39 = sphi 0, %s36
      %s40 = sphi 0, %s39
      %s56 = sphi 0, %s40
      %s62 = sphi 0, %s64
      %s65 = sphi 0, %s62
      %s66 = sphi 0, %s65
      %s82 = sphi 0, %s66
      %s86 = sphi 0, %s86
      %s88 = sphi 0, %s86
      %s89 = sphi 0, %s88
      %s103 = sphi 0, %s89
      %s109 = sphi 0, %s111
      %s112 = sphi 0, %s109
      %s113 = sphi 0, %s112
      %s129 = sphi 0, %s113
      %s135 = sphi 0, %s137
      %s138 = sphi 0, %s135
      %s139 = sphi 0, %s138
      %s155 = sphi 0, %s139
      %s159 = sphi 0, %s159
      %s161 = sphi 0, %s159
      %s162 = sphi 0, %s161
      %s176 = sphi 0, %s162
      %s182 = sphi 0, %s184
      %s185 = sphi 0, %s182
      %s186 = sphi 0, %s185
      %s202 = sphi 0, %s186
    $region4: #{bayesian_gcn_conv_pallas.1} parent=1 // loop_header_branch
      %15 = sbr.rel (%p13) target = $region8
    $region5: #{bayesian_gcn_conv_pallas.1} parent=1 // loop_body
      %s17 = ssub.s32 %s12, 1
      %s18 = ssub.s32 %s12, 2
      %s25 = sadd.s32 1, %s20
      %p26 = scmp.ge.s32.totalorder %s25, 2
      %s27 = scalar_select %p26, 0, %s25
      %s28 = sadd.s32 1, %s19
      %s29 = scalar_select %p26, %s28, %s19
      %p30 = scmp.ge.s32.totalorder %s29, 4
      %s31 = scalar_select %p30, 0, %s29
      %s32 = ssub.s32 %s19, %s31
      %s33 = ssub.s32 %s20, %s27
      %s34 = sor.u32 %s32, %s33
      %p35 = scmp.eq.s32.totalorder %s34, 0
      %s37 = sadd.s32 %s36, 1
      %s38 = scalar_select %p35, %s36, %s37
      %p41 = pneg %p35
      %p42 = scmp.eq.s32.totalorder %s12, 7
      %p43 = por %p41, %p42
      %p44 = scmp.ne.s32.totalorder %s36, %s39
      %p45 = scmp.eq.s32.totalorder %s12, 0
      %p46 = por %p44, %p45
      %p47 = scmp.ne.s32.totalorder %s36, %s39
      %p48 = scmp.eq.s32.totalorder %s17, 7
      %p49 = por %p47, %p48
      %p50 = scmp.ne.s32.totalorder %s39, %s40
      %p51 = scmp.eq.s32.totalorder %s17, 0
      %p52 = por %p50, %p51
      %p53 = scmp.ne.s32.totalorder %s39, %s40
      %p54 = scmp.eq.s32.totalorder %s18, 7
      %p55 = por %p53, %p54
      %p57 = scmp.ne.s32.totalorder %s40, %s56
      %p58 = scmp.eq.s32.totalorder %s18, 0
      %p59 = por %p57, %p58
      %s60 = ssub.s32 %s20, %s27
      %p61 = scmp.eq.s32.totalorder %s60, 0
      %s63 = sadd.s32 %s62, 1
      %s64 = scalar_select %p61, %s62, %s63
      %p67 = pneg %p61
      %p68 = scmp.eq.s32.totalorder %s12, 7
      %p69 = por %p67, %p68
      %p70 = scmp.ne.s32.totalorder %s62, %s65
      %p71 = scmp.eq.s32.totalorder %s12, 0
      %p72 = por %p70, %p71
      %p73 = scmp.ne.s32.totalorder %s62, %s65
      %p74 = scmp.eq.s32.totalorder %s17, 7
      %p75 = por %p73, %p74
      %p76 = scmp.ne.s32.totalorder %s65, %s66
      %p77 = scmp.eq.s32.totalorder %s17, 0
      %p78 = por %p76, %p77
      %p79 = scmp.ne.s32.totalorder %s65, %s66
      %p80 = scmp.eq.s32.totalorder %s18, 7
      %p81 = por %p79, %p80
      %p83 = scmp.ne.s32.totalorder %s66, %s82
      %p84 = scmp.eq.s32.totalorder %s18, 0
      %p85 = por %p83, %p84
      %s87 = sadd.s32 %s86, 1
      %p90 = scmp.eq.s32.totalorder %s12, 7
      %p91 = scmp.ne.s32.totalorder %s86, %s88
      %p92 = scmp.eq.s32.totalorder %s12, 0
      %p93 = por %p91, %p92
      %p94 = scmp.ne.s32.totalorder %s86, %s88
      %p95 = scmp.eq.s32.totalorder %s17, 7
      %p96 = por %p94, %p95
      %p97 = scmp.ne.s32.totalorder %s88, %s89
      %p98 = scmp.eq.s32.totalorder %s17, 0
      %p99 = por %p97, %p98
      %p100 = scmp.ne.s32.totalorder %s88, %s89
      %p101 = scmp.eq.s32.totalorder %s18, 7
      %p102 = por %p100, %p101
      %p104 = scmp.ne.s32.totalorder %s89, %s103
      %p105 = scmp.eq.s32.totalorder %s18, 0
      %p106 = por %p104, %p105
      %s107 = ssub.s32 %s20, %s27
      %p108 = scmp.eq.s32.totalorder %s107, 0
      %s110 = sadd.s32 %s109, 1
      %s111 = scalar_select %p108, %s109, %s110
      %p114 = pneg %p108
      %p115 = scmp.eq.s32.totalorder %s12, 7
      %p116 = por %p114, %p115
      %p117 = scmp.ne.s32.totalorder %s109, %s112
      %p118 = scmp.eq.s32.totalorder %s12, 0
      %p119 = por %p117, %p118
      %p120 = scmp.ne.s32.totalorder %s109, %s112
      %p121 = scmp.eq.s32.totalorder %s17, 7
      %p122 = por %p120, %p121
      %p123 = scmp.ne.s32.totalorder %s112, %s113
      %p124 = scmp.eq.s32.totalorder %s17, 0
      %p125 = por %p123, %p124
      %p126 = scmp.ne.s32.totalorder %s112, %s113
      %p127 = scmp.eq.s32.totalorder %s18, 7
      %p128 = por %p126, %p127
      %p130 = scmp.ne.s32.totalorder %s113, %s129
      %p131 = scmp.eq.s32.totalorder %s18, 0
      %p132 = por %p130, %p131
      %s133 = ssub.s32 %s19, %s31
      %p134 = scmp.eq.s32.totalorder %s133, 0
      %s136 = sadd.s32 %s135, 1
      %s137 = scalar_select %p134, %s135, %s136
      %p140 = pneg %p134
      %p141 = scmp.eq.s32.totalorder %s12, 7
      %p142 = por %p140, %p141
      %p143 = scmp.ne.s32.totalorder %s135, %s138
      %p144 = scmp.eq.s32.totalorder %s12, 0
      %p145 = por %p143, %p144
      %p146 = scmp.ne.s32.totalorder %s135, %s138
      %p147 = scmp.eq.s32.totalorder %s17, 7
      %p148 = por %p146, %p147
      %p149 = scmp.ne.s32.totalorder %s138, %s139
      %p150 = scmp.eq.s32.totalorder %s17, 0
      %p151 = por %p149, %p150
      %p152 = scmp.ne.s32.totalorder %s138, %s139
      %p153 = scmp.eq.s32.totalorder %s18, 7
      %p154 = por %p152, %p153
      %p156 = scmp.ne.s32.totalorder %s139, %s155
      %p157 = scmp.eq.s32.totalorder %s18, 0
      %p158 = por %p156, %p157
      %s160 = sadd.s32 %s159, 1
      %p163 = scmp.eq.s32.totalorder %s12, 7
      %p164 = scmp.ne.s32.totalorder %s159, %s161
      %p165 = scmp.eq.s32.totalorder %s12, 0
      %p166 = por %p164, %p165
      %p167 = scmp.ne.s32.totalorder %s159, %s161
      %p168 = scmp.eq.s32.totalorder %s17, 7
      %p169 = por %p167, %p168
      %p170 = scmp.ne.s32.totalorder %s161, %s162
      %p171 = scmp.eq.s32.totalorder %s17, 0
      %p172 = por %p170, %p171
      %p173 = scmp.ne.s32.totalorder %s161, %s162
      %p174 = scmp.eq.s32.totalorder %s18, 7
      %p175 = por %p173, %p174
      %p177 = scmp.ne.s32.totalorder %s162, %s176
      %p178 = scmp.eq.s32.totalorder %s18, 0
      %p179 = por %p177, %p178
      %s180 = ssub.s32 %s19, %s31
      %p181 = scmp.eq.s32.totalorder %s180, 0
      %s183 = sadd.s32 %s182, 1
      %s184 = scalar_select %p181, %s182, %s183
      %p187 = pneg %p181
      %p188 = scmp.eq.s32.totalorder %s12, 7
      %p189 = por %p187, %p188
      %p190 = scmp.ne.s32.totalorder %s182, %s185
      %p191 = scmp.eq.s32.totalorder %s12, 0
      %p192 = por %p190, %p191
      %p193 = scmp.ne.s32.totalorder %s182, %s185
      %p194 = scmp.eq.s32.totalorder %s17, 7
      %p195 = por %p193, %p194
      %p196 = scmp.ne.s32.totalorder %s185, %s186
      %p197 = scmp.eq.s32.totalorder %s17, 0
      %p198 = por %p196, %p197
      %p199 = scmp.ne.s32.totalorder %s185, %s186
      %p200 = scmp.eq.s32.totalorder %s18, 7
      %p201 = por %p199, %p200
      %p203 = scmp.ne.s32.totalorder %s186, %s202
      %p204 = scmp.eq.s32.totalorder %s18, 0
      %p205 = por %p203, %p204
      %p206 = scmp.le.s32.totalorder 1, %s12
      %p207 = scmp.lt.s32.totalorder %s12, 9
      %p208 = pnand %p206, %p207
      %p209 = pneg %p208
      // Predicated region
      $region9: #{bayesian_gcn_conv_pallas.1} parent=5 // pred_check
        _
      $region10: #{bayesian_gcn_conv_pallas.1} parent=5 // pred_check_branch
        %211 = sbr.rel (%p208) target = $region12
      $region11: #{bayesian_gcn_conv_pallas.1} parent=5 // pred_region
        %s212 = ssub.s32 %s12, 1
        // Predicated region
        $region13: #{bayesian_gcn_conv_pallas.1} parent=11 // pred_check
          %p213 = pneg %p99
        $region14: #{bayesian_gcn_conv_pallas.1} parent=11 // pred_check_branch
          %215 = sbr.rel (%p213) target = $region16
        $region15: #{bayesian_gcn_conv_pallas.1} parent=11 // pred_region
          _
        $region16: #{bayesian_gcn_conv_pallas.1} parent=11 // pred_fallthru
          _
        // Predicated region
        $region17: #{bayesian_gcn_conv_pallas.1} parent=11 // pred_check
          %p216 = pneg %p172
        $region18: #{bayesian_gcn_conv_pallas.1} parent=11 // pred_check_branch
          %218 = sbr.rel (%p216) target = $region20
        $region19: #{bayesian_gcn_conv_pallas.1} parent=11 // pred_region
          _
        $region20: #{bayesian_gcn_conv_pallas.1} parent=11 // pred_fallthru
          _
      $region12: #{bayesian_gcn_conv_pallas.1} parent=5 // pred_fallthru
        _
      %p219 = scmp.lt.s32.totalorder %s12, 8
      // Predicated region
      $region21: #{bayesian_gcn_conv_pallas.1} parent=5 // pred_check
        %p220 = pneg %p219
      $region22: #{bayesian_gcn_conv_pallas.1} parent=5 // pred_check_branch
        %222 = sbr.rel (%p220) target = $region24
      $region23: #{bayesian_gcn_conv_pallas.1} parent=5 // pred_region
        // Predicated region
        $region25: #{bayesian_gcn_conv_pallas.1} parent=23 // pred_check
          %p223 = pneg %p46
        $region26: #{bayesian_gcn_conv_pallas.1} parent=23 // pred_check_branch
          %225 = sbr.rel (%p223) target = $region28
        $region27: #{bayesian_gcn_conv_pallas.1} parent=23 // pred_region
          %s226 = sand.u32 %s36, 1
          %s227 = sand.u32 %s36, 1
          %s228 = smul.addr %s227, 128
          %s229 = scalar_lea.vmem [#allocation2], %s228
          %s230 = smul.u32 16, %s19
          %s231 = smul.u32 2, %s20
          %s232 = smul.addr %s230, 4
          %s233 = sadd.s32 %s231, %s232
          %s234 = smul.addr %s233, 4
          %s235 = scalar_lea.vmem %s0, %s234
          // Predicated region
          $region29: #{bayesian_gcn_conv_pallas.1} parent=27 // pred_check
            _
          $region30: #{bayesian_gcn_conv_pallas.1} parent=27 // pred_check_branch
            %237 = sbr.rel (0) target = $region32
          $region31: #{bayesian_gcn_conv_pallas.1} parent=27 // pred_region
            // Predicated region
            $region33: #{bayesian_gcn_conv_pallas.1} parent=31 // pred_check
              _
            $region34: #{bayesian_gcn_conv_pallas.1} parent=31 // pred_check_branch
              %239 = sbr.rel (0) target = $region36
            $region35: #{bayesian_gcn_conv_pallas.1} parent=31 // pred_region
              // Predicated region
              $region48: #{bayesian_gcn_conv_pallas.1} parent=35 // pred_check
                _
              $region49: #{bayesian_gcn_conv_pallas.1} parent=35 // pred_check_branch
                %284 = sbr.rel (0) target = $region51
              $region50: #{bayesian_gcn_conv_pallas.1} parent=35 // pred_region
                loop: start=0, step=1, limit=1
                $region52: #{bayesian_gcn_conv_pallas.1} parent=50 // loop_pre_header
                  _
                $region53: #{bayesian_gcn_conv_pallas.1} parent=50 // loop_header
                  %s286 = sphi 0, %s290
                  %p287 = scmp.ge.s32.totalorder %s286, 1
                  %s291 = sphi %s235, %s235
                  %s292 = sphi %s229, %s229
                $region54: #{bayesian_gcn_conv_pallas.1} parent=50 // loop_header_branch
                  %289 = sbr.rel (%p287) target = $region58
                $region55: #{bayesian_gcn_conv_pallas.1} parent=50 // loop_body
                  %v293 = vld [vmem:[%s291] sm:$0xff]
                  %294 = vst [vmem:[%s292] sm:$0xff] %v293
                  %v295 = vld [vmem:[%s291 + $0x10] sm:$0xff]
                  %296 = vst [vmem:[%s292 + $0x8] sm:$0xff] %v295
                  %v297 = vld [vmem:[%s291 + $0x20] sm:$0xff]
                  %298 = vst [vmem:[%s292 + $0x10] sm:$0xff] %v297
                  %v299 = vld [vmem:[%s291 + $0x30] sm:$0xff]
                  %300 = vst [vmem:[%s292 + $0x18] sm:$0xff] %v299
                  %v301 = vld [vmem:[%s291 + $0x40] sm:$0xff]
                  %302 = vst [vmem:[%s292 + $0x20] sm:$0xff] %v301
                  %v303 = vld [vmem:[%s291 + $0x50] sm:$0xff]
                  %304 = vst [vmem:[%s292 + $0x28] sm:$0xff] %v303
                  %v305 = vld [vmem:[%s291 + $0x60] sm:$0xff]
                  %306 = vst [vmem:[%s292 + $0x30] sm:$0xff] %v305
                  %v307 = vld [vmem:[%s291 + $0x70] sm:$0xff]
                  %308 = vst [vmem:[%s292 + $0x38] sm:$0xff] %v307
                  %v309 = vld [vmem:[%s291 + $0x80] sm:$0xff]
                  %310 = vst [vmem:[%s292 + $0x40] sm:$0xff] %v309
                  %v311 = vld [vmem:[%s291 + $0x90] sm:$0xff]
                  %312 = vst [vmem:[%s292 + $0x48] sm:$0xff] %v311
                  %v313 = vld [vmem:[%s291 + $0xa0] sm:$0xff]
                  %314 = vst [vmem:[%s292 + $0x50] sm:$0xff] %v313
                  %v315 = vld [vmem:[%s291 + $0xb0] sm:$0xff]
                  %316 = vst [vmem:[%s292 + $0x58] sm:$0xff] %v315
                  %v317 = vld [vmem:[%s291 + $0xc0] sm:$0xff]
                  %318 = vst [vmem:[%s292 + $0x60] sm:$0xff] %v317
                  %v319 = vld [vmem:[%s291 + $0xd0] sm:$0xff]
                  %320 = vst [vmem:[%s292 + $0x68] sm:$0xff] %v319
                  %v321 = vld [vmem:[%s291 + $0xe0] sm:$0xff]
                  %322 = vst [vmem:[%s292 + $0x70] sm:$0xff] %v321
                  %v323 = vld [vmem:[%s291 + $0xf0] sm:$0xff]
                  %324 = vst [vmem:[%s292 + $0x78] sm:$0xff] %v323
                $region56: #{bayesian_gcn_conv_pallas.1} parent=50 // loop_footer
                  %s290 = sadd.s32 1, %s286
                $region57: #{bayesian_gcn_conv_pallas.1} parent=50 // loop_footer_branch
                  %285 = sbr.rel target = $region53
                $region58: #{bayesian_gcn_conv_pallas.1} parent=50 // loop_exit
                  _
              $region51: #{bayesian_gcn_conv_pallas.1} parent=35 // pred_fallthru
                _
              // Predicated region
              $region59: #{bayesian_gcn_conv_pallas.1} parent=35 // pred_check
                _
              $region60: #{bayesian_gcn_conv_pallas.1} parent=35 // pred_check_branch
                %326 = sbr.rel target = $region62
              $region61: #{bayesian_gcn_conv_pallas.1} parent=35 // pred_region
                _
              $region62: #{bayesian_gcn_conv_pallas.1} parent=35 // pred_fallthru
                _
            $region36: #{bayesian_gcn_conv_pallas.1} parent=31 // pred_fallthru
              _
            // Predicated region
            $region37: #{bayesian_gcn_conv_pallas.1} parent=31 // pred_check
              _
            $region38: #{bayesian_gcn_conv_pallas.1} parent=31 // pred_check_branch
              %241 = sbr.rel target = $region40
            $region39: #{bayesian_gcn_conv_pallas.1} parent=31 // pred_region
              loop: start=0, step=1, limit=1
              $region41: #{bayesian_gcn_conv_pallas.1} parent=39 // loop_pre_header
                _
              $region42: #{bayesian_gcn_conv_pallas.1} parent=39 // loop_header
                %s244 = sphi 0, %s248
                %p245 = scmp.ge.s32.totalorder %s244, 1
                %s249 = sphi %s235, %s235
                %s250 = sphi %s229, %s229
              $region43: #{bayesian_gcn_conv_pallas.1} parent=39 // loop_header_branch
                %247 = sbr.rel (%p245) target = $region47
              $region44: #{bayesian_gcn_conv_pallas.1} parent=39 // loop_body
                %v251 = vld [vmem:[%s249] sm:$0xff]
                %252 = vst [vmem:[%s250] sm:$0xff] %v251
                %v253 = vld [vmem:[%s249 + $0x10] sm:$0xff]
                %254 = vst [vmem:[%s250 + $0x8] sm:$0xff] %v253
                %v255 = vld [vmem:[%s249 + $0x20] sm:$0xff]
                %256 = vst [vmem:[%s250 + $0x10] sm:$0xff] %v255
                %v257 = vld [vmem:[%s249 + $0x30] sm:$0xff]
                %258 = vst [vmem:[%s250 + $0x18] sm:$0xff] %v257
                %v259 = vld [vmem:[%s249 + $0x40] sm:$0xff]
                %260 = vst [vmem:[%s250 + $0x20] sm:$0xff] %v259
                %v261 = vld [vmem:[%s249 + $0x50] sm:$0xff]
                %262 = vst [vmem:[%s250 + $0x28] sm:$0xff] %v261
                %v263 = vld [vmem:[%s249 + $0x60] sm:$0xff]
                %264 = vst [vmem:[%s250 + $0x30] sm:$0xff] %v263
                %v265 = vld [vmem:[%s249 + $0x70] sm:$0xff]
                %266 = vst [vmem:[%s250 + $0x38] sm:$0xff] %v265
                %v267 = vld [vmem:[%s249 + $0x80] sm:$0xff]
                %268 = vst [vmem:[%s250 + $0x40] sm:$0xff] %v267
                %v269 = vld [vmem:[%s249 + $0x90] sm:$0xff]
                %270 = vst [vmem:[%s250 + $0x48] sm:$0xff] %v269
                %v271 = vld [vmem:[%s249 + $0xa0] sm:$0xff]
                %272 = vst [vmem:[%s250 + $0x50] sm:$0xff] %v271
                %v273 = vld [vmem:[%s249 + $0xb0] sm:$0xff]
                %274 = vst [vmem:[%s250 + $0x58] sm:$0xff] %v273
                %v275 = vld [vmem:[%s249 + $0xc0] sm:$0xff]
                %276 = vst [vmem:[%s250 + $0x60] sm:$0xff] %v275
                %v277 = vld [vmem:[%s249 + $0xd0] sm:$0xff]
                %278 = vst [vmem:[%s250 + $0x68] sm:$0xff] %v277
                %v279 = vld [vmem:[%s249 + $0xe0] sm:$0xff]
                %280 = vst [vmem:[%s250 + $0x70] sm:$0xff] %v279
                %v281 = vld [vmem:[%s249 + $0xf0] sm:$0xff]
                %282 = vst [vmem:[%s250 + $0x78] sm:$0xff] %v281
              $region45: #{bayesian_gcn_conv_pallas.1} parent=39 // loop_footer
                %s248 = sadd.s32 1, %s244
              $region46: #{bayesian_gcn_conv_pallas.1} parent=39 // loop_footer_branch
                %243 = sbr.rel target = $region42
              $region47: #{bayesian_gcn_conv_pallas.1} parent=39 // loop_exit
                _
            $region40: #{bayesian_gcn_conv_pallas.1} parent=31 // pred_fallthru
              _
          $region32: #{bayesian_gcn_conv_pallas.1} parent=27 // pred_fallthru
            _
          %327 = vnop
        $region28: #{bayesian_gcn_conv_pallas.1} parent=23 // pred_fallthru
          _
        // Predicated region
        $region63: #{bayesian_gcn_conv_pallas.1} parent=23 // pred_check
          %p328 = pneg %p72
        $region64: #{bayesian_gcn_conv_pallas.1} parent=23 // pred_check_branch
          %330 = sbr.rel (%p328) target = $region66
        $region65: #{bayesian_gcn_conv_pallas.1} parent=23 // pred_region
          %s331 = smul.u32 32, %s20
          %p332 = scmp.lt.s32.totalorder %s331, 63
          %s333 = scalar_select %p332, %s331, 63
          %s334 = smul.addr %s333, 4
          %s335 = scalar_lea.vmem %s1, %s334
          %s336 = smul.u32 32, %s20
        $region66: #{bayesian_gcn_conv_pallas.1} parent=23 // pred_fallthru
          _
        // Predicated region
        $region67: #{bayesian_gcn_conv_pallas.1} parent=23 // pred_check
          %p337 = pneg %p119
        $region68: #{bayesian_gcn_conv_pallas.1} parent=23 // pred_check_branch
          %339 = sbr.rel (%p337) target = $region70
        $region69: #{bayesian_gcn_conv_pallas.1} parent=23 // pred_region
          %s340 = smul.u32 32, %s20
          %p341 = scmp.lt.s32.totalorder %s340, 63
          %s342 = scalar_select %p341, %s340, 63
          %s343 = smul.addr %s342, 8
          %s344 = scalar_lea.vmem %s3, %s343
          %s345 = smul.u32 32, %s20
        $region70: #{bayesian_gcn_conv_pallas.1} parent=23 // pred_fallthru
          _
        // Predicated region
        $region71: #{bayesian_gcn_conv_pallas.1} parent=23 // pred_check
          %p346 = pneg %p145
        $region72: #{bayesian_gcn_conv_pallas.1} parent=23 // pred_check_branch
          %348 = sbr.rel (%p346) target = $region74
        $region73: #{bayesian_gcn_conv_pallas.1} parent=23 // pred_region
          %s349 = smul.u32 16, %s19
          %p350 = scmp.lt.s32.totalorder %s349, 63
          %s351 = scalar_select %p350, %s349, 63
          %s352 = smul.addr %s351, 8
          %s353 = scalar_lea.vmem %s4, %s352
          %s354 = smul.u32 16, %s19
        $region74: #{bayesian_gcn_conv_pallas.1} parent=23 // pred_fallthru
          _
      $region24: #{bayesian_gcn_conv_pallas.1} parent=5 // pred_fallthru
        _
      %p355 = scmp.le.s32.totalorder 1, %s12
      %p356 = scmp.lt.s32.totalorder %s12, 9
      %p357 = pnand %p355, %p356
      %p358 = pneg %p357
      // Predicated region
      $region75: #{bayesian_gcn_conv_pallas.1} parent=5 // pred_check
        _
      $region76: #{bayesian_gcn_conv_pallas.1} parent=5 // pred_check_branch
        %360 = sbr.rel (%p357) target = $region78
      $region77: #{bayesian_gcn_conv_pallas.1} parent=5 // pred_region
        %s361 = ssub.s32 %s12, 1
        %s362 = sand.u32 %s39, 1
        %s363 = sand.u32 %s39, 1
        %s364 = smul.addr %s363, 128
        %s365 = scalar_lea.vmem [#allocation2], %s364
        // Predicated region
        $region79: #{bayesian_gcn_conv_pallas.1} parent=77 // pred_check
          %p366 = pneg %p52
        $region80: #{bayesian_gcn_conv_pallas.1} parent=77 // pred_check_branch
          %368 = sbr.rel (%p366) target = $region82
        $region81: #{bayesian_gcn_conv_pallas.1} parent=77 // pred_region
          _
        $region82: #{bayesian_gcn_conv_pallas.1} parent=77 // pred_fallthru
          _
        %s369 = sand.u32 %s39, 1
        %s370 = sand.u32 %s39, 1
        %s371 = smul.addr %s370, 128
        %s372 = scalar_lea.vmem [#allocation2], %s371
        %p373 = pneg %p52
        %p374 = pneg %p49
        %s375 = smul.u32 32, %s22
        %p376 = scmp.lt.s32.totalorder %s375, 63
        %s377 = scalar_select %p376, %s375, 63
        %s378 = smul.addr %s377, 4
        %s379 = scalar_lea.vmem %s1, %s378
        %p380 = pneg %p78
        %p381 = pneg %p75
        %p382 = pneg %p99
        %p383 = pneg %p96
        %s384 = smul.u32 32, %s22
        %p385 = scmp.lt.s32.totalorder %s384, 63
        %s386 = scalar_select %p385, %s384, 63
        %s387 = smul.addr %s386, 8
        %s388 = scalar_lea.vmem %s3, %s387
        %p389 = pneg %p125
        %p390 = pneg %p122
        %s391 = smul.u32 16, %s21
        %p392 = scmp.lt.s32.totalorder %s391, 63
        %s393 = scalar_select %p392, %s391, 63
        %s394 = smul.addr %s393, 8
        %s395 = scalar_lea.vmem %s4, %s394
        %p396 = pneg %p151
        %p397 = pneg %p148
        %p398 = pneg %p172
        %p399 = pneg %p169
        %p400 = pneg %p198
        %p401 = pneg %p195
        %s402 = smul.u32 16, %s21
        %p403 = scmp.lt.s32.totalorder %s402, 63
        %s404 = scalar_select %p403, %s402, 63
        %s405 = smul.addr %s404, 8
        %s406 = scalar_lea.vmem %s6, %s405
        %s407 = smul.u32 16, %s21
        %s408 = smul.u32 2, %s22
        %s409 = smul.u32 32, %s22
        %p410 = scmp.lt.s32.totalorder %s409, 63
        %s411 = scalar_select %p410, %s409, 63
        %s412 = smul.addr %s411, 4
        %s413 = scalar_lea.vmem %s1, %s412
        %s414 = smul.u32 32, %s22
        %s415 = smul.u32 32, %s22
        %p416 = scmp.lt.s32.totalorder %s415, 63
        %s417 = scalar_select %p416, %s415, 63
        %s418 = smul.addr %s417, 8
        %s419 = scalar_lea.vmem %s3, %s418
        %s420 = smul.u32 32, %s22
        %s421 = smul.u32 16, %s21
        %p422 = scmp.lt.s32.totalorder %s421, 63
        %s423 = scalar_select %p422, %s421, 63
        %s424 = smul.addr %s423, 8
        %s425 = scalar_lea.vmem %s4, %s424
        %s426 = smul.u32 16, %s21
        %s427 = smul.u32 16, %s21
        %p428 = scmp.lt.s32.totalorder %s427, 63
        %s429 = scalar_select %p428, %s427, 63
        %s430 = smul.addr %s429, 8
        %s431 = scalar_lea.vmem %s6, %s430
        %s432 = smul.u32 16, %s21
        %p434 = scmp.eq.s32.totalorder %s22, 0
        // Predicated region
        $region83: #{bayesian_gcn_conv_pallas.1} parent=77 // pred_check
          %p435 = pneg %p434
        $region84: #{bayesian_gcn_conv_pallas.1} parent=77 // pred_check_branch
          %437 = sbr.rel (%p435) target = $region86
        $region85: #{bayesian_gcn_conv_pallas.1} parent=77 // pred_region
          %438 = vst [vmem:[%s431] sm:$0xff] 0.0
          %439 = vst [vmem:[%s431 + $0x8] sm:$0xff] 0.0
          %440 = vst [vmem:[%s431 + $0x10] sm:$0xff] 0.0
          %441 = vst [vmem:[%s431 + $0x18] sm:$0xff] 0.0
          %442 = vst [vmem:[%s431 + $0x20] sm:$0xff] 0.0
          %443 = vst [vmem:[%s431 + $0x28] sm:$0xff] 0.0
          %444 = vst [vmem:[%s431 + $0x30] sm:$0xff] 0.0
          %445 = vst [vmem:[%s431 + $0x38] sm:$0xff] 0.0
          %446 = vst [vmem:[%s431 + $0x40] sm:$0xff] 0.0
          %447 = vst [vmem:[%s431 + $0x48] sm:$0xff] 0.0
          %448 = vst [vmem:[%s431 + $0x50] sm:$0xff] 0.0
          %449 = vst [vmem:[%s431 + $0x58] sm:$0xff] 0.0
          %450 = vst [vmem:[%s431 + $0x60] sm:$0xff] 0.0
          %451 = vst [vmem:[%s431 + $0x68] sm:$0xff] 0.0
          %452 = vst [vmem:[%s431 + $0x70] sm:$0xff] 0.0
          %453 = vst [vmem:[%s431 + $0x78] sm:$0xff] 0.0
        $region86: #{bayesian_gcn_conv_pallas.1} parent=77 // pred_fallthru
          _
        %v454 = vld [vmem:[%s413] sm:$0xf]
        %v455 = vld [vmem:[%s413 + $0x4] sm:$0xf]
        %v456 = vld [vmem:[%s413 + $0x8] sm:$0xf]
        %v457 = vld [vmem:[%s413 + $0xc] sm:$0xf]
        %v458 = vld [vmem:[%s413 + $0x10] sm:$0xf]
        %v459 = vld [vmem:[%s413 + $0x14] sm:$0xf]
        %v460 = vld [vmem:[%s413 + $0x18] sm:$0xf]
        %v461 = vld [vmem:[%s413 + $0x1c] sm:$0xf]
        %v462 = vld [vmem:[%s413 + $0x20] sm:$0xf]
        %v463 = vld [vmem:[%s413 + $0x24] sm:$0xf]
        %v464 = vld [vmem:[%s413 + $0x28] sm:$0xf]
        %v465 = vld [vmem:[%s413 + $0x2c] sm:$0xf]
        %v466 = vld [vmem:[%s413 + $0x30] sm:$0xf]
        %v467 = vld [vmem:[%s413 + $0x34] sm:$0xf]
        %v468 = vld [vmem:[%s413 + $0x38] sm:$0xf]
        %v469 = vld [vmem:[%s413 + $0x3c] sm:$0xf]
        %v470 = vld [vmem:[%s413 + $0x40] sm:$0xf]
        %v471 = vld [vmem:[%s413 + $0x44] sm:$0xf]
        %v472 = vld [vmem:[%s413 + $0x48] sm:$0xf]
        %v473 = vld [vmem:[%s413 + $0x4c] sm:$0xf]
        %v474 = vld [vmem:[%s413 + $0x50] sm:$0xf]
        %v475 = vld [vmem:[%s413 + $0x54] sm:$0xf]
        %v476 = vld [vmem:[%s413 + $0x58] sm:$0xf]
        %v477 = vld [vmem:[%s413 + $0x5c] sm:$0xf]
        %v478 = vld [vmem:[%s413 + $0x60] sm:$0xf]
        %v479 = vld [vmem:[%s413 + $0x64] sm:$0xf]
        %v480 = vld [vmem:[%s413 + $0x68] sm:$0xf]
        %v481 = vld [vmem:[%s413 + $0x6c] sm:$0xf]
        %v482 = vld [vmem:[%s413 + $0x70] sm:$0xf]
        %v483 = vld [vmem:[%s413 + $0x74] sm:$0xf]
        %v484 = vld [vmem:[%s413 + $0x78] sm:$0xf]
        %v485 = vld [vmem:[%s413 + $0x7c] sm:$0xf]
        %v486 = vld [vmem:[%s2] sm:$0xf]
        %v487 = vld [vmem:[%s2 + $0x4] sm:$0xf]
        %v488 = vld [vmem:[%s2 + $0x8] sm:$0xf]
        %v489 = vld [vmem:[%s2 + $0xc] sm:$0xf]
        %v490 = vld [vmem:[%s2 + $0x10] sm:$0xf]
        %v491 = vld [vmem:[%s2 + $0x14] sm:$0xf]
        %v492 = vld [vmem:[%s2 + $0x18] sm:$0xf]
        %v493 = vld [vmem:[%s2 + $0x1c] sm:$0xf]
        %v494 = vld [vmem:[%s2 + $0x20] sm:$0xf]
        %v495 = vld [vmem:[%s2 + $0x24] sm:$0xf]
        %v496 = vld [vmem:[%s2 + $0x28] sm:$0xf]
        %v497 = vld [vmem:[%s2 + $0x2c] sm:$0xf]
        %v498 = vld [vmem:[%s2 + $0x30] sm:$0xf]
        %v499 = vld [vmem:[%s2 + $0x34] sm:$0xf]
        %v500 = vld [vmem:[%s2 + $0x38] sm:$0xf]
        %v501 = vld [vmem:[%s2 + $0x3c] sm:$0xf]
        %v534 = vunpack.c.l.b16 %v454
        %v535 = vunpack.c.l.b16 %v455
        %v536 = vunpack.c.l.b16 %v456
        %v537 = vunpack.c.l.b16 %v457
        %v538 = vunpack.c.l.b16 %v458
        %v539 = vunpack.c.l.b16 %v459
        %v540 = vunpack.c.l.b16 %v460
        %v541 = vunpack.c.l.b16 %v461
        %v542 = vunpack.c.l.b16 %v462
        %v543 = vunpack.c.l.b16 %v463
        %v544 = vunpack.c.l.b16 %v464
        %v545 = vunpack.c.l.b16 %v465
        %v546 = vunpack.c.l.b16 %v466
        %v547 = vunpack.c.l.b16 %v467
        %v548 = vunpack.c.l.b16 %v468
        %v549 = vunpack.c.l.b16 %v469
        %v550 = vunpack.c.l.b16 %v470
        %v551 = vunpack.c.l.b16 %v471
        %v552 = vunpack.c.l.b16 %v472
        %v553 = vunpack.c.l.b16 %v473
        %v554 = vunpack.c.l.b16 %v474
        %v555 = vunpack.c.l.b16 %v475
        %v556 = vunpack.c.l.b16 %v476
        %v557 = vunpack.c.l.b16 %v477
        %v558 = vunpack.c.l.b16 %v478
        %v559 = vunpack.c.l.b16 %v479
        %v560 = vunpack.c.l.b16 %v480
        %v561 = vunpack.c.l.b16 %v481
        %v562 = vunpack.c.l.b16 %v482
        %v563 = vunpack.c.l.b16 %v483
        %v564 = vunpack.c.l.b16 %v484
        %v565 = vunpack.c.l.b16 %v485
        %v566 = vpack.c.b16 %v535, %v534
        %v567 = vpack.c.b16 %v537, %v536
        %v568 = vpack.c.b16 %v539, %v538
        %v569 = vpack.c.b16 %v541, %v540
        %v570 = vpack.c.b16 %v543, %v542
        %v571 = vpack.c.b16 %v545, %v544
        %v572 = vpack.c.b16 %v547, %v546
        %v573 = vpack.c.b16 %v549, %v548
        %v574 = vpack.c.b16 %v551, %v550
        %v575 = vpack.c.b16 %v553, %v552
        %v576 = vpack.c.b16 %v555, %v554
        %v577 = vpack.c.b16 %v557, %v556
        %v578 = vpack.c.b16 %v559, %v558
        %v579 = vpack.c.b16 %v561, %v560
        %v580 = vpack.c.b16 %v563, %v562
        %v581 = vpack.c.b16 %v565, %v564
        %v614 = vunpack.c.l.b16 %v486
        %v615 = vunpack.c.l.b16 %v487
        %v616 = vunpack.c.l.b16 %v488
        %v617 = vunpack.c.l.b16 %v489
        %v618 = vunpack.c.l.b16 %v490
        %v619 = vunpack.c.l.b16 %v491
        %v620 = vunpack.c.l.b16 %v492
        %v621 = vunpack.c.l.b16 %v493
        %v622 = vunpack.c.l.b16 %v494
        %v623 = vunpack.c.l.b16 %v495
        %v624 = vunpack.c.l.b16 %v496
        %v625 = vunpack.c.l.b16 %v497
        %v626 = vunpack.c.l.b16 %v498
        %v627 = vunpack.c.l.b16 %v499
        %v628 = vunpack.c.l.b16 %v500
        %v629 = vunpack.c.l.b16 %v501
        %v630 = vpack.c.b16 %v615, %v614
        %v631 = vpack.c.b16 %v617, %v616
        %v632 = vpack.c.b16 %v619, %v618
        %v633 = vpack.c.b16 %v621, %v620
        %v634 = vpack.c.b16 %v623, %v622
        %v635 = vpack.c.b16 %v625, %v624
        %v636 = vpack.c.b16 %v627, %v626
        %v637 = vpack.c.b16 %v629, %v628
        %646 = vmatprep.subr.bf16.mxu0 0
        %647 = vmatpush1.bf16.msra.mxu0 %v630
        %648 = vmatprep.subr.bf16.mxu0 0
        %649 = vmatpush1.bf16.msra.mxu0 %v631
        %650 = vmatprep.subr.bf16.mxu0 0
        %651 = vmatpush1.bf16.msra.mxu0 %v632
        %652 = vmatprep.subr.bf16.mxu0 0
        %653 = vmatpush1.bf16.msra.mxu0 %v633
        %654 = vmatprep.subr.bf16.mxu0 0
        %655 = vmatpush1.bf16.msra.mxu0 %v634
        %656 = vmatprep.subr.bf16.mxu0 0
        %657 = vmatpush1.bf16.msra.mxu0 %v635
        %658 = vmatprep.subr.bf16.mxu0 0
        %659 = vmatpush1.bf16.msra.mxu0 %v636
        %660 = vmatprep.subr.bf16.mxu0 0
        %661 = vmatpush1.bf16.msra.mxu0 %v637
        %662 = vmatprep.subr.bf16.mxu0 0
        %663 = vmatpush1.bf16.msra.mxu0 0
        %664 = vmatprep.subr.bf16.mxu0 0
        %665 = vmatpush1.bf16.msra.mxu0 0
        %666 = vmatprep.subr.bf16.mxu0 0
        %667 = vmatpush1.bf16.msra.mxu0 0
        %668 = vmatprep.subr.bf16.mxu0 0
        %669 = vmatpush1.bf16.msra.mxu0 0
        %670 = vmatprep.subr.bf16.mxu0 0
        %671 = vmatpush1.bf16.msra.mxu0 0
        %672 = vmatprep.subr.bf16.mxu0 0
        %673 = vmatpush1.bf16.msra.mxu0 0
        %674 = vmatprep.subr.bf16.mxu0 0
        %675 = vmatpush1.bf16.msra.mxu0 0
        %676 = vmatprep.subr.bf16.mxu0 0
        %677 = vmatpush1.bf16.msra.mxu0 0
        %678 = vmatprep.mubr.bf16.mxu0 0
        %679 = vmatmul.mubr.bf16.gmra.mrb[0].mxu0 %v566
        %v680 = vpop.f32.mrb[0].mxu0
        %v681 = vadd.f32 0.0, %v680
        %v682 = vpop.f32.mrb[0].mxu0
        %v683 = vpop.f32.mrb[0].mxu0
        %v684 = vadd.f32 0.0, %v683
        %v685 = vpop.f32.mrb[0].mxu0
        %686 = vmatprep.mubr.bf16.mxu0 0
        %687 = vmatmul.mubr.bf16.gmra.mrb[0].mxu0 %v567
        %v688 = vpop.f32.mrb[0].mxu0
        %v689 = vadd.f32 0.0, %v688
        %v690 = vpop.f32.mrb[0].mxu0
        %v691 = vpop.f32.mrb[0].mxu0
        %v692 = vadd.f32 0.0, %v691
        %v693 = vpop.f32.mrb[0].mxu0
        %694 = vmatprep.mubr.bf16.mxu0 0
        %695 = vmatmul.mubr.bf16.gmra.mrb[0].mxu0 %v568
        %v696 = vpop.f32.mrb[0].mxu0
        %v697 = vadd.f32 0.0, %v696
        %v698 = vpop.f32.mrb[0].mxu0
        %v699 = vpop.f32.mrb[0].mxu0
        %v700 = vadd.f32 0.0, %v699
        %v701 = vpop.f32.mrb[0].mxu0
        %702 = vmatprep.mubr.bf16.mxu0 0
        %703 = vmatmul.mubr.bf16.gmra.mrb[0].mxu0 %v569
        %v704 = vpop.f32.mrb[0].mxu0
        %v705 = vadd.f32 0.0, %v704
        %v706 = vpop.f32.mrb[0].mxu0
        %v707 = vpop.f32.mrb[0].mxu0
        %v708 = vadd.f32 0.0, %v707
        %v709 = vpop.f32.mrb[0].mxu0
        %710 = vmatprep.mubr.bf16.mxu0 0
        %711 = vmatmul.mubr.bf16.gmra.mrb[0].mxu0 %v570
        %v712 = vpop.f32.mrb[0].mxu0
        %v713 = vadd.f32 0.0, %v712
        %v714 = vpop.f32.mrb[0].mxu0
        %v715 = vpop.f32.mrb[0].mxu0
        %v716 = vadd.f32 0.0, %v715
        %v717 = vpop.f32.mrb[0].mxu0
        %718 = vmatprep.mubr.bf16.mxu0 0
        %719 = vmatmul.mubr.bf16.gmra.mrb[0].mxu0 %v571
        %v720 = vpop.f32.mrb[0].mxu0
        %v721 = vadd.f32 0.0, %v720
        %v722 = vpop.f32.mrb[0].mxu0
        %v723 = vpop.f32.mrb[0].mxu0
        %v724 = vadd.f32 0.0, %v723
        %v725 = vpop.f32.mrb[0].mxu0
        %726 = vmatprep.mubr.bf16.mxu0 0
        %727 = vmatmul.mubr.bf16.gmra.mrb[0].mxu0 %v572
        %v728 = vpop.f32.mrb[0].mxu0
        %v729 = vadd.f32 0.0, %v728
        %v730 = vpop.f32.mrb[0].mxu0
        %v731 = vpop.f32.mrb[0].mxu0
        %v732 = vadd.f32 0.0, %v731
        %v733 = vpop.f32.mrb[0].mxu0
        %734 = vmatprep.mubr.bf16.mxu0 0
        %735 = vmatmul.mubr.bf16.gmra.mrb[0].mxu0 %v573
        %v736 = vpop.f32.mrb[0].mxu0
        %v737 = vadd.f32 0.0, %v736
        %v738 = vpop.f32.mrb[0].mxu0
        %v739 = vpop.f32.mrb[0].mxu0
        %v740 = vadd.f32 0.0, %v739
        %v741 = vpop.f32.mrb[0].mxu0
        %742 = vmatprep.mubr.bf16.mxu0 0
        %743 = vmatmul.mubr.bf16.gmra.mrb[0].mxu0 %v574
        %v744 = vpop.f32.mrb[0].mxu0
        %v745 = vadd.f32 0.0, %v744
        %v746 = vpop.f32.mrb[0].mxu0
        %v747 = vpop.f32.mrb[0].mxu0
        %v748 = vadd.f32 0.0, %v747
        %v749 = vpop.f32.mrb[0].mxu0
        %750 = vmatprep.mubr.bf16.mxu0 0
        %751 = vmatmul.mubr.bf16.gmra.mrb[0].mxu0 %v575
        %v752 = vpop.f32.mrb[0].mxu0
        %v753 = vadd.f32 0.0, %v752
        %v754 = vpop.f32.mrb[0].mxu0
        %v755 = vpop.f32.mrb[0].mxu0
        %v756 = vadd.f32 0.0, %v755
        %v757 = vpop.f32.mrb[0].mxu0
        %758 = vmatprep.mubr.bf16.mxu0 0
        %759 = vmatmul.mubr.bf16.gmra.mrb[0].mxu0 %v576
        %v760 = vpop.f32.mrb[0].mxu0
        %v761 = vadd.f32 0.0, %v760
        %v762 = vpop.f32.mrb[0].mxu0
        %v763 = vpop.f32.mrb[0].mxu0
        %v764 = vadd.f32 0.0, %v763
        %v765 = vpop.f32.mrb[0].mxu0
        %766 = vmatprep.mubr.bf16.mxu0 0
        %767 = vmatmul.mubr.bf16.gmra.mrb[0].mxu0 %v577
        %v768 = vpop.f32.mrb[0].mxu0
        %v769 = vadd.f32 0.0, %v768
        %v770 = vpop.f32.mrb[0].mxu0
        %v771 = vpop.f32.mrb[0].mxu0
        %v772 = vadd.f32 0.0, %v771
        %v773 = vpop.f32.mrb[0].mxu0
        %774 = vmatprep.mubr.bf16.mxu0 0
        %775 = vmatmul.mubr.bf16.gmra.mrb[0].mxu0 %v578
        %v776 = vpop.f32.mrb[0].mxu0
        %v777 = vadd.f32 0.0, %v776
        %v778 = vpop.f32.mrb[0].mxu0
        %v779 = vpop.f32.mrb[0].mxu0
        %v780 = vadd.f32 0.0, %v779
        %v781 = vpop.f32.mrb[0].mxu0
        %782 = vmatprep.mubr.bf16.mxu0 0
        %783 = vmatmul.mubr.bf16.gmra.mrb[0].mxu0 %v579
        %v784 = vpop.f32.mrb[0].mxu0
        %v785 = vadd.f32 0.0, %v784
        %v786 = vpop.f32.mrb[0].mxu0
        %v787 = vpop.f32.mrb[0].mxu0
        %v788 = vadd.f32 0.0, %v787
        %v789 = vpop.f32.mrb[0].mxu0
        %790 = vmatprep.mubr.bf16.mxu0 0
        %791 = vmatmul.mubr.bf16.gmra.mrb[0].mxu0 %v580
        %v792 = vpop.f32.mrb[0].mxu0
        %v793 = vadd.f32 0.0, %v792
        %v794 = vpop.f32.mrb[0].mxu0
        %v795 = vpop.f32.mrb[0].mxu0
        %v796 = vadd.f32 0.0, %v795
        %v797 = vpop.f32.mrb[0].mxu0
        %798 = vmatprep.mubr.bf16.mxu0 0
        %799 = vmatmul.mubr.bf16.gmra.mrb[0].mxu0 %v581
        %v800 = vpop.f32.mrb[0].mxu0
        %v801 = vadd.f32 0.0, %v800
        %v802 = vpop.f32.mrb[0].mxu0
        %v803 = vpop.f32.mrb[0].mxu0
        %v804 = vadd.f32 0.0, %v803
        %v805 = vpop.f32.mrb[0].mxu0
        %806 = vdwg.mxu0
        %v807 = vld [vmem:[%s419] sm:$0xff]
        %v808 = vld [vmem:[%s419 + $0x8] sm:$0xff]
        %v809 = vld [vmem:[%s419 + $0x10] sm:$0xff]
        %v810 = vld [vmem:[%s419 + $0x18] sm:$0xff]
        %v811 = vld [vmem:[%s419 + $0x20] sm:$0xff]
        %v812 = vld [vmem:[%s419 + $0x28] sm:$0xff]
        %v813 = vld [vmem:[%s419 + $0x30] sm:$0xff]
        %v814 = vld [vmem:[%s419 + $0x38] sm:$0xff]
        %v815 = vld [vmem:[%s419 + $0x40] sm:$0xff]
        %v816 = vld [vmem:[%s419 + $0x48] sm:$0xff]
        %v817 = vld [vmem:[%s419 + $0x50] sm:$0xff]
        %v818 = vld [vmem:[%s419 + $0x58] sm:$0xff]
        %v819 = vld [vmem:[%s419 + $0x60] sm:$0xff]
        %v820 = vld [vmem:[%s419 + $0x68] sm:$0xff]
        %v821 = vld [vmem:[%s419 + $0x70] sm:$0xff]
        %v822 = vld [vmem:[%s419 + $0x78] sm:$0xff]
        %v823 = vld [vmem:[%s419 + $0x80] sm:$0xff]
        %v824 = vld [vmem:[%s419 + $0x88] sm:$0xff]
        %v825 = vld [vmem:[%s419 + $0x90] sm:$0xff]
        %v826 = vld [vmem:[%s419 + $0x98] sm:$0xff]
        %v827 = vld [vmem:[%s419 + $0xa0] sm:$0xff]
        %v828 = vld [vmem:[%s419 + $0xa8] sm:$0xff]
        %v829 = vld [vmem:[%s419 + $0xb0] sm:$0xff]
        %v830 = vld [vmem:[%s419 + $0xb8] sm:$0xff]
        %v831 = vld [vmem:[%s419 + $0xc0] sm:$0xff]
        %v832 = vld [vmem:[%s419 + $0xc8] sm:$0xff]
        %v833 = vld [vmem:[%s419 + $0xd0] sm:$0xff]
        %v834 = vld [vmem:[%s419 + $0xd8] sm:$0xff]
        %v835 = vld [vmem:[%s419 + $0xe0] sm:$0xff]
        %v836 = vld [vmem:[%s419 + $0xe8] sm:$0xff]
        %v837 = vld [vmem:[%s419 + $0xf0] sm:$0xff]
        %v838 = vld [vmem:[%s419 + $0xf8] sm:$0xff]
        %840 = vset.pattern.permute.xlu0 0
        %841 = vperm.xlu0 %840, %v807
        %v842 = vpop.permute.xlu0 %841
        %845 = vset.pattern.permute.xlu0 0
        %846 = vperm.xlu0 %845, %v808
        %v847 = vpop.permute.xlu0 %846
        %850 = vset.pattern.permute.xlu0 0
        %851 = vperm.xlu0 %850, %v809
        %v852 = vpop.permute.xlu0 %851
        %855 = vset.pattern.permute.xlu0 0
        %856 = vperm.xlu0 %855, %v810
        %v857 = vpop.permute.xlu0 %856
        %860 = vset.pattern.permute.xlu0 0
        %861 = vperm.xlu0 %860, %v811
        %v862 = vpop.permute.xlu0 %861
        %865 = vset.pattern.permute.xlu0 0
        %866 = vperm.xlu0 %865, %v812
        %v867 = vpop.permute.xlu0 %866
        %870 = vset.pattern.permute.xlu0 0
        %871 = vperm.xlu0 %870, %v813
        %v872 = vpop.permute.xlu0 %871
        %875 = vset.pattern.permute.xlu0 0
        %876 = vperm.xlu0 %875, %v814
        %v877 = vpop.permute.xlu0 %876
        %880 = vset.pattern.permute.xlu0 0
        %881 = vperm.xlu0 %880, %v815
        %v882 = vpop.permute.xlu0 %881
        %885 = vset.pattern.permute.xlu0 0
        %886 = vperm.xlu0 %885, %v816
        %v887 = vpop.permute.xlu0 %886
        %890 = vset.pattern.permute.xlu0 0
        %891 = vperm.xlu0 %890, %v817
        %v892 = vpop.permute.xlu0 %891
        %895 = vset.pattern.permute.xlu0 0
        %896 = vperm.xlu0 %895, %v818
        %v897 = vpop.permute.xlu0 %896
        %900 = vset.pattern.permute.xlu0 0
        %901 = vperm.xlu0 %900, %v819
        %v902 = vpop.permute.xlu0 %901
        %905 = vset.pattern.permute.xlu0 0
        %906 = vperm.xlu0 %905, %v820
        %v907 = vpop.permute.xlu0 %906
        %910 = vset.pattern.permute.xlu0 0
        %911 = vperm.xlu0 %910, %v821
        %v912 = vpop.permute.xlu0 %911
        %915 = vset.pattern.permute.xlu0 0
        %916 = vperm.xlu0 %915, %v822
        %v917 = vpop.permute.xlu0 %916
        %920 = vset.pattern.permute.xlu0 0
        %921 = vperm.xlu0 %920, %v823
        %v922 = vpop.permute.xlu0 %921
        %925 = vset.pattern.permute.xlu0 0
        %926 = vperm.xlu0 %925, %v824
        %v927 = vpop.permute.xlu0 %926
        %930 = vset.pattern.permute.xlu0 0
        %931 = vperm.xlu0 %930, %v825
        %v932 = vpop.permute.xlu0 %931
        %935 = vset.pattern.permute.xlu0 0
        %936 = vperm.xlu0 %935, %v826
        %v937 = vpop.permute.xlu0 %936
        %940 = vset.pattern.permute.xlu0 0
        %941 = vperm.xlu0 %940, %v827
        %v942 = vpop.permute.xlu0 %941
        %945 = vset.pattern.permute.xlu0 0
        %946 = vperm.xlu0 %945, %v828
        %v947 = vpop.permute.xlu0 %946
        %950 = vset.pattern.permute.xlu0 0
        %951 = vperm.xlu0 %950, %v829
        %v952 = vpop.permute.xlu0 %951
        %955 = vset.pattern.permute.xlu0 0
        %956 = vperm.xlu0 %955, %v830
        %v957 = vpop.permute.xlu0 %956
        %960 = vset.pattern.permute.xlu0 0
        %961 = vperm.xlu0 %960, %v831
        %v962 = vpop.permute.xlu0 %961
        %965 = vset.pattern.permute.xlu0 0
        %966 = vperm.xlu0 %965, %v832
        %v967 = vpop.permute.xlu0 %966
        %970 = vset.pattern.permute.xlu0 0
        %971 = vperm.xlu0 %970, %v833
        %v972 = vpop.permute.xlu0 %971
        %975 = vset.pattern.permute.xlu0 0
        %976 = vperm.xlu0 %975, %v834
        %v977 = vpop.permute.xlu0 %976
        %980 = vset.pattern.permute.xlu0 0
        %981 = vperm.xlu0 %980, %v835
        %v982 = vpop.permute.xlu0 %981
        %985 = vset.pattern.permute.xlu0 0
        %986 = vperm.xlu0 %985, %v836
        %v987 = vpop.permute.xlu0 %986
        %990 = vset.pattern.permute.xlu0 0
        %991 = vperm.xlu0 %990, %v837
        %v992 = vpop.permute.xlu0 %991
        %995 = vset.pattern.permute.xlu0 0
        %996 = vperm.xlu0 %995, %v838
        %v997 = vpop.permute.xlu0 %996
        %v999 = vmul.f32 %v681, %v842
        %v1000 = vmul.f32 %v684, %v847
        %v1001 = vmul.f32 %v689, %v852
        %v1002 = vmul.f32 %v692, %v857
        %v1003 = vmul.f32 %v697, %v862
        %v1004 = vmul.f32 %v700, %v867
        %v1005 = vmul.f32 %v705, %v872
        %v1006 = vmul.f32 %v708, %v877
        %v1007 = vmul.f32 %v713, %v882
        %v1008 = vmul.f32 %v716, %v887
        %v1009 = vmul.f32 %v721, %v892
        %v1010 = vmul.f32 %v724, %v897
        %v1011 = vmul.f32 %v729, %v902
        %v1012 = vmul.f32 %v732, %v907
        %v1013 = vmul.f32 %v737, %v912
        %v1014 = vmul.f32 %v740, %v917
        %v1015 = vmul.f32 %v745, %v922
        %v1016 = vmul.f32 %v748, %v927
        %v1017 = vmul.f32 %v753, %v932
        %v1018 = vmul.f32 %v756, %v937
        %v1019 = vmul.f32 %v761, %v942
        %v1020 = vmul.f32 %v764, %v947
        %v1021 = vmul.f32 %v769, %v952
        %v1022 = vmul.f32 %v772, %v957
        %v1023 = vmul.f32 %v777, %v962
        %v1024 = vmul.f32 %v780, %v967
        %v1025 = vmul.f32 %v785, %v972
        %v1026 = vmul.f32 %v788, %v977
        %v1027 = vmul.f32 %v793, %v982
        %v1028 = vmul.f32 %v796, %v987
        %v1029 = vmul.f32 %v801, %v992
        %v1030 = vmul.f32 %v804, %v997
        %v1031 = vpack.c.bf16 %v1000, %v999
        %v1032 = vpack.c.bf16 %v1002, %v1001
        %v1033 = vpack.c.bf16 %v1004, %v1003
        %v1034 = vpack.c.bf16 %v1006, %v1005
        %v1035 = vpack.c.bf16 %v1008, %v1007
        %v1036 = vpack.c.bf16 %v1010, %v1009
        %v1037 = vpack.c.bf16 %v1012, %v1011
        %v1038 = vpack.c.bf16 %v1014, %v1013
        %v1039 = vpack.c.bf16 %v1016, %v1015
        %v1040 = vpack.c.bf16 %v1018, %v1017
        %v1041 = vpack.c.bf16 %v1020, %v1019
        %v1042 = vpack.c.bf16 %v1022, %v1021
        %v1043 = vpack.c.bf16 %v1024, %v1023
        %v1044 = vpack.c.bf16 %v1026, %v1025
        %v1045 = vpack.c.bf16 %v1028, %v1027
        %v1046 = vpack.c.bf16 %v1030, %v1029
        %v1047 = vld [vmem:[%s431] sm:$0xff]
        %v1048 = vld [vmem:[%s431 + $0x8] sm:$0xff]
        %v1049 = vld [vmem:[%s431 + $0x10] sm:$0xff]
        %v1050 = vld [vmem:[%s431 + $0x18] sm:$0xff]
        %v1051 = vld [vmem:[%s431 + $0x20] sm:$0xff]
        %v1052 = vld [vmem:[%s431 + $0x28] sm:$0xff]
        %v1053 = vld [vmem:[%s431 + $0x30] sm:$0xff]
        %v1054 = vld [vmem:[%s431 + $0x38] sm:$0xff]
        %v1055 = vld [vmem:[%s431 + $0x40] sm:$0xff]
        %v1056 = vld [vmem:[%s431 + $0x48] sm:$0xff]
        %v1057 = vld [vmem:[%s431 + $0x50] sm:$0xff]
        %v1058 = vld [vmem:[%s431 + $0x58] sm:$0xff]
        %v1059 = vld [vmem:[%s431 + $0x60] sm:$0xff]
        %v1060 = vld [vmem:[%s431 + $0x68] sm:$0xff]
        %v1061 = vld [vmem:[%s431 + $0x70] sm:$0xff]
        %v1062 = vld [vmem:[%s431 + $0x78] sm:$0xff]
        %v1063 = vld [vmem:[%s365] sm:$0xff]
        %v1064 = vld [vmem:[%s365 + $0x8] sm:$0xff]
        %v1065 = vld [vmem:[%s365 + $0x10] sm:$0xff]
        %v1066 = vld [vmem:[%s365 + $0x18] sm:$0xff]
        %v1067 = vld [vmem:[%s365 + $0x20] sm:$0xff]
        %v1068 = vld [vmem:[%s365 + $0x28] sm:$0xff]
        %v1069 = vld [vmem:[%s365 + $0x30] sm:$0xff]
        %v1070 = vld [vmem:[%s365 + $0x38] sm:$0xff]
        %v1071 = vld [vmem:[%s365 + $0x40] sm:$0xff]
        %v1072 = vld [vmem:[%s365 + $0x48] sm:$0xff]
        %v1073 = vld [vmem:[%s365 + $0x50] sm:$0xff]
        %v1074 = vld [vmem:[%s365 + $0x58] sm:$0xff]
        %v1075 = vld [vmem:[%s365 + $0x60] sm:$0xff]
        %v1076 = vld [vmem:[%s365 + $0x68] sm:$0xff]
        %v1077 = vld [vmem:[%s365 + $0x70] sm:$0xff]
        %v1078 = vld [vmem:[%s365 + $0x78] sm:$0xff]
        %v1095 = vunpack.c.l.b16 %v1063
        %v1096 = vunpack.c.h.b16 %v1063
        %v1097 = vunpack.c.l.b16 %v1064
        %v1098 = vunpack.c.h.b16 %v1064
        %v1099 = vunpack.c.l.b16 %v1065
        %v1100 = vunpack.c.h.b16 %v1065
        %v1101 = vunpack.c.l.b16 %v1066
        %v1102 = vunpack.c.h.b16 %v1066
        %v1103 = vunpack.c.l.b16 %v1067
        %v1104 = vunpack.c.h.b16 %v1067
        %v1105 = vunpack.c.l.b16 %v1068
        %v1106 = vunpack.c.h.b16 %v1068
        %v1107 = vunpack.c.l.b16 %v1069
        %v1108 = vunpack.c.h.b16 %v1069
        %v1109 = vunpack.c.l.b16 %v1070
        %v1110 = vunpack.c.h.b16 %v1070
        %v1111 = vunpack.c.l.b16 %v1071
        %v1112 = vunpack.c.h.b16 %v1071
        %v1113 = vunpack.c.l.b16 %v1072
        %v1114 = vunpack.c.h.b16 %v1072
        %v1115 = vunpack.c.l.b16 %v1073
        %v1116 = vunpack.c.h.b16 %v1073
        %v1117 = vunpack.c.l.b16 %v1074
        %v1118 = vunpack.c.h.b16 %v1074
        %v1119 = vunpack.c.l.b16 %v1075
        %v1120 = vunpack.c.h.b16 %v1075
        %v1121 = vunpack.c.l.b16 %v1076
        %v1122 = vunpack.c.h.b16 %v1076
        %v1123 = vunpack.c.l.b16 %v1077
        %v1124 = vunpack.c.h.b16 %v1077
        %v1125 = vunpack.c.l.b16 %v1078
        %v1126 = vunpack.c.h.b16 %v1078
        %v1127 = vpack.c.b16 %v1097, %v1095
        %v1128 = vpack.c.b16 %v1098, %v1096
        %v1129 = vpack.c.b16 %v1101, %v1099
        %v1130 = vpack.c.b16 %v1102, %v1100
        %v1131 = vpack.c.b16 %v1105, %v1103
        %v1132 = vpack.c.b16 %v1106, %v1104
        %v1133 = vpack.c.b16 %v1109, %v1107
        %v1134 = vpack.c.b16 %v1110, %v1108
        %v1135 = vpack.c.b16 %v1113, %v1111
        %v1136 = vpack.c.b16 %v1114, %v1112
        %v1137 = vpack.c.b16 %v1117, %v1115
        %v1138 = vpack.c.b16 %v1118, %v1116
        %v1139 = vpack.c.b16 %v1121, %v1119
        %v1140 = vpack.c.b16 %v1122, %v1120
        %v1141 = vpack.c.b16 %v1125, %v1123
        %v1142 = vpack.c.b16 %v1126, %v1124
        %1159 = vmatprep.subr.bf16.mxu0 0
        %1160 = vmatpush1.bf16.msra.mxu0 %v1031
        %1161 = vmatprep.subr.bf16.mxu0 0
        %1162 = vmatpush1.bf16.msra.mxu0 %v1032
        %1163 = vmatprep.subr.bf16.mxu0 0
        %1164 = vmatpush1.bf16.msra.mxu0 %v1033
        %1165 = vmatprep.subr.bf16.mxu0 0
        %1166 = vmatpush1.bf16.msra.mxu0 %v1034
        %1167 = vmatprep.subr.bf16.mxu0 0
        %1168 = vmatpush1.bf16.msra.mxu0 %v1035
        %1169 = vmatprep.subr.bf16.mxu0 0
        %1170 = vmatpush1.bf16.msra.mxu0 %v1036
        %1171 = vmatprep.subr.bf16.mxu0 0
        %1172 = vmatpush1.bf16.msra.mxu0 %v1037
        %1173 = vmatprep.subr.bf16.mxu0 0
        %1174 = vmatpush1.bf16.msra.mxu0 %v1038
        %1175 = vmatprep.subr.bf16.mxu0 0
        %1176 = vmatpush1.bf16.msra.mxu0 %v1039
        %1177 = vmatprep.subr.bf16.mxu0 0
        %1178 = vmatpush1.bf16.msra.mxu0 %v1040
        %1179 = vmatprep.subr.bf16.mxu0 0
        %1180 = vmatpush1.bf16.msra.mxu0 %v1041
        %1181 = vmatprep.subr.bf16.mxu0 0
        %1182 = vmatpush1.bf16.msra.mxu0 %v1042
        %1183 = vmatprep.subr.bf16.mxu0 0
        %1184 = vmatpush1.bf16.msra.mxu0 %v1043
        %1185 = vmatprep.subr.bf16.mxu0 0
        %1186 = vmatpush1.bf16.msra.mxu0 %v1044
        %1187 = vmatprep.subr.bf16.mxu0 0
        %1188 = vmatpush1.bf16.msra.mxu0 %v1045
        %1189 = vmatprep.subr.bf16.mxu0 0
        %1190 = vmatpush1.bf16.msra.mxu0 %v1046
        %1191 = vmatprep.mubr.bf16.mxu0 %v1128
        %1192 = vmatmul.mubr.bf16.gmra.mrb[0].mxu0 %v1127
        %v1193 = vpop.f32.mrb[0].mxu0
        %v1194 = vadd.f32 0.0, %v1193
        %v1195 = vpop.f32.mrb[0].mxu0
        %v1196 = vpop.f32.mrb[0].mxu0
        %v1197 = vadd.f32 0.0, %v1196
        %v1198 = vpop.f32.mrb[0].mxu0
        %1199 = vmatprep.mubr.bf16.mxu0 %v1130
        %1200 = vmatmul.mubr.bf16.gmra.mrb[0].mxu0 %v1129
        %v1201 = vpop.f32.mrb[0].mxu0
        %v1202 = vadd.f32 0.0, %v1201
        %v1203 = vpop.f32.mrb[0].mxu0
        %v1204 = vpop.f32.mrb[0].mxu0
        %v1205 = vadd.f32 0.0, %v1204
        %v1206 = vpop.f32.mrb[0].mxu0
        %1207 = vmatprep.mubr.bf16.mxu0 %v1132
        %1208 = vmatmul.mubr.bf16.gmra.mrb[0].mxu0 %v1131
        %v1209 = vpop.f32.mrb[0].mxu0
        %v1210 = vadd.f32 0.0, %v1209
        %v1211 = vpop.f32.mrb[0].mxu0
        %v1212 = vpop.f32.mrb[0].mxu0
        %v1213 = vadd.f32 0.0, %v1212
        %v1214 = vpop.f32.mrb[0].mxu0
        %1215 = vmatprep.mubr.bf16.mxu0 %v1134
        %1216 = vmatmul.mubr.bf16.gmra.mrb[0].mxu0 %v1133
        %v1217 = vpop.f32.mrb[0].mxu0
        %v1218 = vadd.f32 0.0, %v1217
        %v1219 = vpop.f32.mrb[0].mxu0
        %v1220 = vpop.f32.mrb[0].mxu0
        %v1221 = vadd.f32 0.0, %v1220
        %v1222 = vpop.f32.mrb[0].mxu0
        %1223 = vmatprep.mubr.bf16.mxu0 %v1136
        %1224 = vmatmul.mubr.bf16.gmra.mrb[0].mxu0 %v1135
        %v1225 = vpop.f32.mrb[0].mxu0
        %v1226 = vadd.f32 0.0, %v1225
        %v1227 = vpop.f32.mrb[0].mxu0
        %v1228 = vpop.f32.mrb[0].mxu0
        %v1229 = vadd.f32 0.0, %v1228
        %v1230 = vpop.f32.mrb[0].mxu0
        %1231 = vmatprep.mubr.bf16.mxu0 %v1138
        %1232 = vmatmul.mubr.bf16.gmra.mrb[0].mxu0 %v1137
        %v1233 = vpop.f32.mrb[0].mxu0
        %v1234 = vadd.f32 0.0, %v1233
        %v1235 = vpop.f32.mrb[0].mxu0
        %v1236 = vpop.f32.mrb[0].mxu0
        %v1237 = vadd.f32 0.0, %v1236
        %v1238 = vpop.f32.mrb[0].mxu0
        %1239 = vmatprep.mubr.bf16.mxu0 %v1140
        %1240 = vmatmul.mubr.bf16.gmra.mrb[0].mxu0 %v1139
        %v1241 = vpop.f32.mrb[0].mxu0
        %v1242 = vadd.f32 0.0, %v1241
        %v1243 = vpop.f32.mrb[0].mxu0
        %v1244 = vpop.f32.mrb[0].mxu0
        %v1245 = vadd.f32 0.0, %v1244
        %v1246 = vpop.f32.mrb[0].mxu0
        %1247 = vmatprep.mubr.bf16.mxu0 %v1142
        %1248 = vmatmul.mubr.bf16.gmra.mrb[0].mxu0 %v1141
        %v1249 = vpop.f32.mrb[0].mxu0
        %v1250 = vadd.f32 0.0, %v1249
        %v1251 = vpop.f32.mrb[0].mxu0
        %v1252 = vpop.f32.mrb[0].mxu0
        %v1253 = vadd.f32 0.0, %v1252
        %v1254 = vpop.f32.mrb[0].mxu0
        %1255 = vdwg.mxu0
        %v1256 = vadd.f32 %v1047, %v1194
        %v1257 = vadd.f32 %v1048, %v1197
        %v1258 = vadd.f32 %v1049, %v1202
        %v1259 = vadd.f32 %v1050, %v1205
        %v1260 = vadd.f32 %v1051, %v1210
        %v1261 = vadd.f32 %v1052, %v1213
        %v1262 = vadd.f32 %v1053, %v1218
        %v1263 = vadd.f32 %v1054, %v1221
        %v1264 = vadd.f32 %v1055, %v1226
        %v1265 = vadd.f32 %v1056, %v1229
        %v1266 = vadd.f32 %v1057, %v1234
        %v1267 = vadd.f32 %v1058, %v1237
        %v1268 = vadd.f32 %v1059, %v1242
        %v1269 = vadd.f32 %v1060, %v1245
        %v1270 = vadd.f32 %v1061, %v1250
        %v1271 = vadd.f32 %v1062, %v1253
        %1272 = vst [vmem:[%s431] sm:$0xff] %v1256
        %1273 = vst [vmem:[%s431 + $0x8] sm:$0xff] %v1257
        %1274 = vst [vmem:[%s431 + $0x10] sm:$0xff] %v1258
        %1275 = vst [vmem:[%s431 + $0x18] sm:$0xff] %v1259
        %1276 = vst [vmem:[%s431 + $0x20] sm:$0xff] %v1260
        %1277 = vst [vmem:[%s431 + $0x28] sm:$0xff] %v1261
        %1278 = vst [vmem:[%s431 + $0x30] sm:$0xff] %v1262
        %1279 = vst [vmem:[%s431 + $0x38] sm:$0xff] %v1263
        %1280 = vst [vmem:[%s431 + $0x40] sm:$0xff] %v1264
        %1281 = vst [vmem:[%s431 + $0x48] sm:$0xff] %v1265
        %1282 = vst [vmem:[%s431 + $0x50] sm:$0xff] %v1266
        %1283 = vst [vmem:[%s431 + $0x58] sm:$0xff] %v1267
        %1284 = vst [vmem:[%s431 + $0x60] sm:$0xff] %v1268
        %1285 = vst [vmem:[%s431 + $0x68] sm:$0xff] %v1269
        %1286 = vst [vmem:[%s431 + $0x70] sm:$0xff] %v1270
        %1287 = vst [vmem:[%s431 + $0x78] sm:$0xff] %v1271
        %p1288 = scmp.eq.s32.totalorder %s22, 1
        // Predicated region
        $region87: #{bayesian_gcn_conv_pallas.1} parent=77 // pred_check
          %p1289 = pneg %p1288
        $region88: #{bayesian_gcn_conv_pallas.1} parent=77 // pred_check_branch
          %1291 = sbr.rel (%p1289) target = $region90
        $region89: #{bayesian_gcn_conv_pallas.1} parent=77 // pred_region
          %v1292 = vld [vmem:[%s431] sm:$0xff]
          %v1293 = vld [vmem:[%s431 + $0x8] sm:$0xff]
          %v1294 = vld [vmem:[%s431 + $0x10] sm:$0xff]
          %v1295 = vld [vmem:[%s431 + $0x18] sm:$0xff]
          %v1296 = vld [vmem:[%s431 + $0x20] sm:$0xff]
          %v1297 = vld [vmem:[%s431 + $0x28] sm:$0xff]
          %v1298 = vld [vmem:[%s431 + $0x30] sm:$0xff]
          %v1299 = vld [vmem:[%s431 + $0x38] sm:$0xff]
          %v1300 = vld [vmem:[%s431 + $0x40] sm:$0xff]
          %v1301 = vld [vmem:[%s431 + $0x48] sm:$0xff]
          %v1302 = vld [vmem:[%s431 + $0x50] sm:$0xff]
          %v1303 = vld [vmem:[%s431 + $0x58] sm:$0xff]
          %v1304 = vld [vmem:[%s431 + $0x60] sm:$0xff]
          %v1305 = vld [vmem:[%s431 + $0x68] sm:$0xff]
          %v1306 = vld [vmem:[%s431 + $0x70] sm:$0xff]
          %v1307 = vld [vmem:[%s431 + $0x78] sm:$0xff]
          %v1308 = vld [vmem:[%s425] sm:$0xff]
          %v1309 = vld [vmem:[%s425 + $0x8] sm:$0xff]
          %v1310 = vld [vmem:[%s425 + $0x10] sm:$0xff]
          %v1311 = vld [vmem:[%s425 + $0x18] sm:$0xff]
          %v1312 = vld [vmem:[%s425 + $0x20] sm:$0xff]
          %v1313 = vld [vmem:[%s425 + $0x28] sm:$0xff]
          %v1314 = vld [vmem:[%s425 + $0x30] sm:$0xff]
          %v1315 = vld [vmem:[%s425 + $0x38] sm:$0xff]
          %v1316 = vld [vmem:[%s425 + $0x40] sm:$0xff]
          %v1317 = vld [vmem:[%s425 + $0x48] sm:$0xff]
          %v1318 = vld [vmem:[%s425 + $0x50] sm:$0xff]
          %v1319 = vld [vmem:[%s425 + $0x58] sm:$0xff]
          %v1320 = vld [vmem:[%s425 + $0x60] sm:$0xff]
          %v1321 = vld [vmem:[%s425 + $0x68] sm:$0xff]
          %v1322 = vld [vmem:[%s425 + $0x70] sm:$0xff]
          %v1323 = vld [vmem:[%s425 + $0x78] sm:$0xff]
          %1325 = vset.pattern.permute.xlu0 0
          %1326 = vperm.xlu0 %1325, %v1308
          %v1327 = vpop.permute.xlu0 %1326
          %1330 = vset.pattern.permute.xlu0 0
          %1331 = vperm.xlu0 %1330, %v1309
          %v1332 = vpop.permute.xlu0 %1331
          %1335 = vset.pattern.permute.xlu0 0
          %1336 = vperm.xlu0 %1335, %v1310
          %v1337 = vpop.permute.xlu0 %1336
          %1340 = vset.pattern.permute.xlu0 0
          %1341 = vperm.xlu0 %1340, %v1311
          %v1342 = vpop.permute.xlu0 %1341
          %1345 = vset.pattern.permute.xlu0 0
          %1346 = vperm.xlu0 %1345, %v1312
          %v1347 = vpop.permute.xlu0 %1346
          %1350 = vset.pattern.permute.xlu0 0
          %1351 = vperm.xlu0 %1350, %v1313
          %v1352 = vpop.permute.xlu0 %1351
          %1355 = vset.pattern.permute.xlu0 0
          %1356 = vperm.xlu0 %1355, %v1314
          %v1357 = vpop.permute.xlu0 %1356
          %1360 = vset.pattern.permute.xlu0 0
          %1361 = vperm.xlu0 %1360, %v1315
          %v1362 = vpop.permute.xlu0 %1361
          %1365 = vset.pattern.permute.xlu0 0
          %1366 = vperm.xlu0 %1365, %v1316
          %v1367 = vpop.permute.xlu0 %1366
          %1370 = vset.pattern.permute.xlu0 0
          %1371 = vperm.xlu0 %1370, %v1317
          %v1372 = vpop.permute.xlu0 %1371
          %1375 = vset.pattern.permute.xlu0 0
          %1376 = vperm.xlu0 %1375, %v1318
          %v1377 = vpop.permute.xlu0 %1376
          %1380 = vset.pattern.permute.xlu0 0
          %1381 = vperm.xlu0 %1380, %v1319
          %v1382 = vpop.permute.xlu0 %1381
          %1385 = vset.pattern.permute.xlu0 0
          %1386 = vperm.xlu0 %1385, %v1320
          %v1387 = vpop.permute.xlu0 %1386
          %1390 = vset.pattern.permute.xlu0 0
          %1391 = vperm.xlu0 %1390, %v1321
          %v1392 = vpop.permute.xlu0 %1391
          %1395 = vset.pattern.permute.xlu0 0
          %1396 = vperm.xlu0 %1395, %v1322
          %v1397 = vpop.permute.xlu0 %1396
          %1400 = vset.pattern.permute.xlu0 0
          %1401 = vperm.xlu0 %1400, %v1323
          %v1402 = vpop.permute.xlu0 %1401
          %v1404 = vmul.f32 %v1292, %v1327
          %v1405 = vmul.f32 %v1293, %v1332
          %v1406 = vmul.f32 %v1294, %v1337
          %v1407 = vmul.f32 %v1295, %v1342
          %v1408 = vmul.f32 %v1296, %v1347
          %v1409 = vmul.f32 %v1297, %v1352
          %v1410 = vmul.f32 %v1298, %v1357
          %v1411 = vmul.f32 %v1299, %v1362
          %v1412 = vmul.f32 %v1300, %v1367
          %v1413 = vmul.f32 %v1301, %v1372
          %v1414 = vmul.f32 %v1302, %v1377
          %v1415 = vmul.f32 %v1303, %v1382
          %v1416 = vmul.f32 %v1304, %v1387
          %v1417 = vmul.f32 %v1305, %v1392
          %v1418 = vmul.f32 %v1306, %v1397
          %v1419 = vmul.f32 %v1307, %v1402
          %v1420 = vld [vmem:[%s5] sm:$0x1]
          %v1422 = vlaneseq
          %v1423 = vshrl.u32 %v1422, 7
          %v1424 = vsub.s32 0, %v1423
          %v1425 = vrot.slane %v1420, %v1424
          %v1427 = vadd.f32 %v1404, %v1425
          %v1428 = vadd.f32 %v1405, %v1425
          %v1429 = vadd.f32 %v1406, %v1425
          %v1430 = vadd.f32 %v1407, %v1425
          %v1431 = vadd.f32 %v1408, %v1425
          %v1432 = vadd.f32 %v1409, %v1425
          %v1433 = vadd.f32 %v1410, %v1425
          %v1434 = vadd.f32 %v1411, %v1425
          %v1435 = vadd.f32 %v1412, %v1425
          %v1436 = vadd.f32 %v1413, %v1425
          %v1437 = vadd.f32 %v1414, %v1425
          %v1438 = vadd.f32 %v1415, %v1425
          %v1439 = vadd.f32 %v1416, %v1425
          %v1440 = vadd.f32 %v1417, %v1425
          %v1441 = vadd.f32 %v1418, %v1425
          %v1442 = vadd.f32 %v1419, %v1425
          %1443 = vst [vmem:[%s431] sm:$0xff] %v1427
          %1444 = vst [vmem:[%s431 + $0x8] sm:$0xff] %v1428
          %1445 = vst [vmem:[%s431 + $0x10] sm:$0xff] %v1429
          %1446 = vst [vmem:[%s431 + $0x18] sm:$0xff] %v1430
          %1447 = vst [vmem:[%s431 + $0x20] sm:$0xff] %v1431
          %1448 = vst [vmem:[%s431 + $0x28] sm:$0xff] %v1432
          %1449 = vst [vmem:[%s431 + $0x30] sm:$0xff] %v1433
          %1450 = vst [vmem:[%s431 + $0x38] sm:$0xff] %v1434
          %1451 = vst [vmem:[%s431 + $0x40] sm:$0xff] %v1435
          %1452 = vst [vmem:[%s431 + $0x48] sm:$0xff] %v1436
          %1453 = vst [vmem:[%s431 + $0x50] sm:$0xff] %v1437
          %1454 = vst [vmem:[%s431 + $0x58] sm:$0xff] %v1438
          %1455 = vst [vmem:[%s431 + $0x60] sm:$0xff] %v1439
          %1456 = vst [vmem:[%s431 + $0x68] sm:$0xff] %v1440
          %1457 = vst [vmem:[%s431 + $0x70] sm:$0xff] %v1441
          %1458 = vst [vmem:[%s431 + $0x78] sm:$0xff] %v1442
        $region90: #{bayesian_gcn_conv_pallas.1} parent=77 // pred_fallthru
          _
        %s1459 = smul.u32 16, %s21
        %p1460 = scmp.lt.s32.totalorder %s1459, 63
        %s1461 = scalar_select %p1460, %s1459, 63
        %s1462 = smul.addr %s1461, 8
        %s1463 = scalar_lea.vmem %s6, %s1462
        // Predicated region
        $region91: #{bayesian_gcn_conv_pallas.1} parent=77 // pred_check
          %p1464 = pneg %p195
        $region92: #{bayesian_gcn_conv_pallas.1} parent=77 // pred_check_branch
          %1466 = sbr.rel (%p1464) target = $region94
        $region93: #{bayesian_gcn_conv_pallas.1} parent=77 // pred_region
          %s1467 = smul.u32 16, %s21
        $region94: #{bayesian_gcn_conv_pallas.1} parent=77 // pred_fallthru
          _
      $region78: #{bayesian_gcn_conv_pallas.1} parent=5 // pred_fallthru
        _
      %p1468 = scmp.le.s32.totalorder 2, %s12
      // Predicated region
      $region95: #{bayesian_gcn_conv_pallas.1} parent=5 // pred_check
        %p1469 = pneg %p1468
      $region96: #{bayesian_gcn_conv_pallas.1} parent=5 // pred_check_branch
        %1471 = sbr.rel (%p1469) target = $region98
      $region97: #{bayesian_gcn_conv_pallas.1} parent=5 // pred_region
        %s1472 = ssub.s32 %s12, 2
        // Predicated region
        $region99: #{bayesian_gcn_conv_pallas.1} parent=97 // pred_check
          %p1473 = pneg %p201
        $region100: #{bayesian_gcn_conv_pallas.1} parent=97 // pred_check_branch
          %1475 = sbr.rel (%p1473) target = $region102
        $region101: #{bayesian_gcn_conv_pallas.1} parent=97 // pred_region
          %s1476 = smul.u32 16, %s23
          %p1477 = scmp.lt.s32.totalorder %s1476, 63
          %s1478 = scalar_select %p1477, %s1476, 63
          %s1479 = smul.addr %s1478, 8
          %s1480 = scalar_lea.vmem %s6, %s1479
        $region102: #{bayesian_gcn_conv_pallas.1} parent=97 // pred_fallthru
          _
      $region98: #{bayesian_gcn_conv_pallas.1} parent=5 // pred_fallthru
        _
    $region6: #{bayesian_gcn_conv_pallas.1} parent=1 // loop_footer
      %s16 = sadd.s32 1, %s12
    $region7: #{bayesian_gcn_conv_pallas.1} parent=1 // loop_footer_branch
      %11 = sbr.rel target = $region3
    $region8: #{bayesian_gcn_conv_pallas.1} parent=1 // loop_exit
      _

</llo_original>
